<compile_context>
chip_gen: v7x
topology: tpu7x:2x2x1
jax: 0.10.0
libtpu: 0.0.40
codegen_flags: <defaults>
</compile_context>

<pallas_src>
import functools

import jax
import jax.numpy as jnp
from jax import lax
from jax.experimental import pallas as pl
from jax.experimental.pallas import tpu as pltpu


def _round_up(x, m):
    return ((x + m - 1) // m) * m


def _layernorm_rows(e, gamma, beta, eps):
    """Fused single-pass LayerNorm over the last axis (e is f32, shape (rows, H))."""
    h = e.shape[-1]
    s1 = jnp.sum(e, axis=-1, keepdims=True)
    s2 = jnp.sum(e * e, axis=-1, keepdims=True)
    mean = s1 * (1.0 / h)
    var = jnp.maximum(s2 * (1.0 / h) - mean * mean, 0.0)   # clamp tiny negative roundoff
    return (e - mean) * lax.rsqrt(var + eps) * gamma + beta


# ---------------------------------------------------------------------------
# Kernel 1: default position_ids=None path.
#   * token rows: per-row DMA gather from HBM, sub-chunk pipelined.
#   * position rows: contiguous slab, auto-pipelined via BlockSpec (pos_ref in VMEM).
# ---------------------------------------------------------------------------
def _emb_seqpos_kernel(ids_ref,                # SMEM int32 (B * S_pad,)   [scalar prefetch]
                       tok_hbm,                # HBM (V, H)  memory_space=pl.ANY
                       pos_ref,                # VMEM (tS, H) contiguous position slab
                       gamma_ref, beta_ref,    # VMEM (1, H) f32
                       o_ref,                  # VMEM (tS, H) output tile
                       tok_buf, sems,          # scratch: VMEM (tS, H), DMA sems (nchunks,)
                       *, s_pad, chunk, nchunks, eps):
    tS, _ = o_ref.shape
    s_tile = pl.program_id(0)
    b = pl.program_id(1)
    base = b * s_pad + s_tile * tS

    def issue(c):
        # Fully unrolled (chunk is static): packs many DMA starts per bundle, and the
        # SMEM id reads happen before any .wait() (keeps sst->sld forwarding).
        off = c * chunk
        copies = []
        for r in range(chunk):
            tid = ids_ref[base + off + r]
            cp = pltpu.make_async_copy(tok_hbm.at[pl.ds(tid, 1), :],
                                       tok_buf.at[pl.ds(off + r, 1), :],
                                       sems.at[c])
            cp.start()
            copies.append(cp)
        return copies

    gamma = gamma_ref[...]
    beta = beta_ref[...]

    pending = issue(0)
    for c in range(nchunks):
        # Issue the next chunk's gathers BEFORE waiting/computing on this chunk so the
        # DMAs overlap the LayerNorm (and the tail of this chunk's transfers).
        nxt = issue(c + 1) if c + 1 < nchunks else []
        for cp in pending:       # wait on the exact descriptors that were started
            cp.wait()
        pending = nxt

        rows = pl.ds(c * chunk, chunk)
        e = tok_buf[rows, :].astype(jnp.float32) + pos_ref[rows, :].astype(jnp.float32)
        o_ref[rows, :] = _layernorm_rows(e, gamma, beta, eps).astype(o_ref.dtype)


# ---------------------------------------------------------------------------
# Kernel 2: explicit position_ids path — both tables gathered per-row, same
# sub-chunk pipelining. Separate semaphores per table (equal-sized copies each).
# ---------------------------------------------------------------------------
def _emb_gatherpos_kernel(ids_ref, pids_ref,       # SMEM int32 (B * S_pad,) x2
                          tok_hbm, pos_hbm,        # HBM tables
                          gamma_ref, beta_ref,     # VMEM (1, H)
                          o_ref,                   # VMEM (tS, H)
                          tok_buf, pos_buf,        # VMEM gather buffers
                          tok_sems, pos_sems,      # DMA sems (nchunks,) each
                          *, s_pad, chunk, nchunks, eps):
    tS, _ = o_ref.shape
    s_tile = pl.program_id(0)
    b = pl.program_id(1)
    base = b * s_pad + s_tile * tS

    def issue(c):
        off = c * chunk
        copies = []
        for r in range(chunk):
            tid = ids_ref[base + off + r]
            pid = pids_ref[base + off + r]
            cp_t = pltpu.make_async_copy(tok_hbm.at[pl.ds(tid, 1), :],
                                         tok_buf.at[pl.ds(off + r, 1), :],
                                         tok_sems.at[c])
            cp_p = pltpu.make_async_copy(pos_hbm.at[pl.ds(pid, 1), :],
                                         pos_buf.at[pl.ds(off + r, 1), :],
                                         pos_sems.at[c])
            cp_t.start()
            cp_p.start()
            copies.append(cp_t)
            copies.append(cp_p)
        return copies

    gamma = gamma_ref[...]
    beta = beta_ref[...]

    pending = issue(0)
    for c in range(nchunks):
        nxt = issue(c + 1) if c + 1 < nchunks else []
        for cp in pending:
            cp.wait()
        pending = nxt

        rows = pl.ds(c * chunk, chunk)
        e = tok_buf[rows, :].astype(jnp.float32) + pos_buf[rows, :].astype(jnp.float32)
        o_ref[rows, :] = _layernorm_rows(e, gamma, beta, eps).astype(o_ref.dtype)


def gpt2_embeddings(input_ids, tok_table, pos_table, gamma, beta,
                    position_ids=None, *, token_tile=256, out_dtype=None,
                    eps=1e-12, vmem_limit_bytes=32 * 1024 * 1024):
    """token_emb(ids) + pos_emb(pos) -> LayerNorm(eps=1e-12) -> dropout(identity, eval)."""
    B, S = input_ids.shape
    V, H = tok_table.shape
    P = pos_table.shape[0]
    if out_dtype is None:
        out_dtype = tok_table.dtype

    # Sequence tile (multiple of 8 sublanes) and padded sequence length.
    tS = _round_up(min(token_tile, _round_up(S, 8)), 8)
    S_pad = _round_up(S, tS)
    num_s_tiles = S_pad // tS

    # Sub-chunks for gather/compute overlap; keep each chunk a multiple of 8 rows.
    nchunks = 1
    for c in (4, 3, 2):
        if (tS // 8) % c == 0:
            nchunks = c
            break
    chunk = tS // nchunks

    # Clamp ids so the DMA gather can never read out of range (torch would raise instead).
    ids = jnp.clip(input_ids.astype(jnp.int32), 0, V - 1)
    if S_pad != S:
        ids = jnp.pad(ids, ((0, 0), (0, S_pad - S)))
    ids_flat = ids.reshape(B * S_pad)

    gamma2 = gamma.reshape(1, H).astype(jnp.float32)
    beta2 = beta.reshape(1, H).astype(jnp.float32)

    cparams = pltpu.CompilerParams(
        dimension_semantics=("parallel", "parallel"),
        vmem_limit_bytes=vmem_limit_bytes)

    if position_ids is None:
        # Positions for seq-tile s are rows [s*tS, (s+1)*tS) of pos_table -> plain BlockSpec.
        pos_tab = pos_table
        if P < S_pad:
            pos_tab = jnp.pad(pos_tab, ((0, S_pad - P), (0, 0)))

        kernel = functools.partial(_emb_seqpos_kernel, s_pad=S_pad, chunk=chunk,
                                   nchunks=nchunks, eps=eps)
        out = pl.pallas_call(
            kernel,
            out_shape=jax.ShapeDtypeStruct((B, S_pad, H), out_dtype),
            grid_spec=pltpu.PrefetchScalarGridSpec(
                num_scalar_prefetch=1,
                grid=(num_s_tiles, B),
                in_specs=[
                    pl.BlockSpec(memory_space=pl.ANY),                   # token table (HBM)
                    pl.BlockSpec((tS, H), lambda s, b, ids: (s, 0)),     # contiguous pos slab
                    pl.BlockSpec((1, H), lambda s, b, ids: (0, 0)),      # gamma
                    pl.BlockSpec((1, H), lambda s, b, ids: (0, 0)),      # beta
                ],
                out_specs=pl.BlockSpec((None, tS, H), lambda s, b, ids: (b, s, 0)),
                scratch_shapes=[
                    pltpu.VMEM((tS, H), tok_table.dtype),                # gathered token rows
                    pltpu.SemaphoreType.DMA((nchunks,)),                 # per-chunk sems
                ],
            ),
            compiler_params=cparams,
        )(ids_flat, tok_table, pos_tab, gamma2, beta2)
    else:
        pids = jnp.clip(position_ids.astype(jnp.int32), 0, P - 1)
        if S_pad != S:
            pids = jnp.pad(pids, ((0, 0), (0, S_pad - S)))
        pids_flat = pids.reshape(B * S_pad)

        kernel = functools.partial(_emb_gatherpos_kernel, s_pad=S_pad, chunk=chunk,
                                   nchunks=nchunks, eps=eps)
        out = pl.pallas_call(
            kernel,
            out_shape=jax.ShapeDtypeStruct((B, S_pad, H), out_dtype),
            grid_spec=pltpu.PrefetchScalarGridSpec(
                num_scalar_prefetch=2,
                grid=(num_s_tiles, B),
                in_specs=[
                    pl.BlockSpec(memory_space=pl.ANY),                         # token table
                    pl.BlockSpec(memory_space=pl.ANY),                         # position table
                    pl.BlockSpec((1, H), lambda s, b, ids, pids: (0, 0)),      # gamma
                    pl.BlockSpec((1, H), lambda s, b, ids, pids: (0, 0)),      # beta
                ],
                out_specs=pl.BlockSpec((None, tS, H), lambda s, b, ids, pids: (b, s, 0)),
                scratch_shapes=[
                    pltpu.VMEM((tS, H), tok_table.dtype),
                    pltpu.VMEM((tS, H), pos_table.dtype),
                    pltpu.SemaphoreType.DMA((nchunks,)),
                    pltpu.SemaphoreType.DMA((nchunks,)),
                ],
            ),
            compiler_params=cparams,
        )(ids_flat, pids_flat, tok_table, pos_table, gamma2, beta2)

    return out[:, :S, :]


def _reference(input_ids, tok_table, pos_table, gamma, beta, position_ids=None, eps=1e-12):
    B, S = input_ids.shape
    if position_ids is None:
        position_ids = jnp.broadcast_to(jnp.arange(S, dtype=jnp.int32)[None, :], (B, S))
    tok = tok_table[input_ids].astype(jnp.float32)
    pos = pos_table[position_ids].astype(jnp.float32)
    e = tok + pos
    mean = e.mean(-1, keepdims=True)
    var = ((e - mean) ** 2).mean(-1, keepdims=True)
    return ((e - mean) / jnp.sqrt(var + eps) * gamma.astype(jnp.float32)
            + beta.astype(jnp.float32))


if __name__ == "__main__":
    # Small config: vocab=64, max_position_embeddings=30, hidden=32, batch=2, seq=28.
    VOCAB, MAX_POS, HIDDEN = 64, 30, 32
    B, S = 2, 28

    key = jax.random.PRNGKey(0)
    k_tok, k_pos, k_g, k_b, k_ids = jax.random.split(key, 5)

    tok_table = 0.02 * jax.random.normal(k_tok, (VOCAB, HIDDEN), dtype=jnp.float32)
    tok_table = tok_table.at[0].set(0.0)   # nn.Embedding padding_idx=0 -> zero row
    pos_table = 0.02 * jax.random.normal(k_pos, (MAX_POS, HIDDEN), dtype=jnp.float32)
    gamma = 1.0 + 0.1 * jax.random.normal(k_g, (HIDDEN,), dtype=jnp.float32)
    beta = 0.05 * jax.random.normal(k_b, (HIDDEN,), dtype=jnp.float32)

    input_ids = jax.random.randint(k_ids, (B, S), 0, VOCAB, dtype=jnp.int32)

    # 1) Default path (position_ids=None): contiguous pos-slab BlockSpec + token DMA gather.
    #    token_tile=16 -> S padded 28->32, 2 seq tiles, 2 sub-chunks of 8 rows each.
    out = gpt2_embeddings(input_ids, tok_table, pos_table, gamma, beta, token_tile=16)
    out = jax.block_until_ready(out)
    ref = _reference(input_ids, tok_table, pos_table, gamma, beta)
    assert out.shape == (B, S, HIDDEN)
    assert jnp.allclose(out.astype(jnp.float32), ref, atol=1e-4, rtol=1e-4), \
        "mismatch vs reference (position_ids=None path)"

    # 2) Explicit position_ids path: per-row DMA gather of both tables.
    position_ids = (3 * jnp.arange(S, dtype=jnp.int32)[None, :]
                    + jnp.arange(B, dtype=jnp.int32)[:, None]) % MAX_POS
    out2 = gpt2_embeddings(input_ids, tok_table, pos_table, gamma, beta,
                           position_ids=position_ids, token_tile=16)
    out2 = jax.block_until_ready(out2)
    ref2 = _reference(input_ids, tok_table, pos_table, gamma, beta, position_ids)
    assert jnp.allclose(out2.astype(jnp.float32), ref2, atol=1e-4, rtol=1e-4), \
        "mismatch vs reference (explicit position_ids path)"

    # 3) bf16 writeback (f32 LayerNorm math in-kernel, bf16 store) — halves output bytes.
    out3 = gpt2_embeddings(input_ids, tok_table, pos_table, gamma, beta,
                           token_tile=16, out_dtype=jnp.bfloat16)
    out3 = jax.block_until_ready(out3)
    assert out3.dtype == jnp.bfloat16
    assert jnp.allclose(out3.astype(jnp.float32), ref, atol=6e-2, rtol=6e-2), \
        "mismatch vs reference (bf16 writeback path)"

    print("KERNEL_OK")
</pallas_src>

<mosaic_0001>
module attributes {stable_mosaic.version = 11 : i64} {
  func.func @_emb_seqpos_kernel(%arg0: i32, %arg1: i32, %arg2: memref<64xi32, #tpu.memory_space<smem>>, %arg3: memref<64x32xf32, #tpu.memory_space<any>>, %arg4: memref<16x32xf32, #tpu.memory_space<vmem>>, %arg5: memref<1x32xf32, #tpu.memory_space<vmem>>, %arg6: memref<1x32xf32, #tpu.memory_space<vmem>>, %arg7: memref<1x16x32xf32, #tpu.memory_space<vmem>>, %arg8: memref<16x32xf32, #tpu.memory_space<vmem>>, %arg9: memref<2x!tpu.dma_semaphore, #tpu.memory_space<semaphore_mem>>) attributes {dimension_semantics = [#tpu.dimension_semantics<parallel>, #tpu.dimension_semantics<parallel>], iteration_bounds = array<i64: 2, 2>, scalar_prefetch = 1 : i64, scratch_operands = 2 : i64, tpu.core_type = #tpu.core_type<tc>, window_params = [{}, {transform_indices = @transform_1, window_bounds = array<i64: 16, 32>}, {pipeline_mode = #tpu.pipeline_mode<synchronous>, transform_indices = @transform_2, window_bounds = array<i64: 1, 32>}, {pipeline_mode = #tpu.pipeline_mode<synchronous>, transform_indices = @transform_3, window_bounds = array<i64: 1, 32>}, {transform_indices = @transform_4, window_bounds = array<i64: 1, 16, 32>}]} {
    %c32_i32 = arith.constant 32 : i32
    %0 = arith.muli %arg1, %c32_i32 : i32
    %c16_i32 = arith.constant 16 : i32
    %1 = arith.muli %arg0, %c16_i32 : i32
    %2 = arith.addi %0, %1 : i32
    %c0 = arith.constant 0 : index
    %c0_0 = arith.constant 0 : index
    %3 = vector.load %arg5[%c0, %c0_0] : memref<1x32xf32, #tpu.memory_space<vmem>>, vector<1x32xf32>
    %c0_1 = arith.constant 0 : index
    %c0_2 = arith.constant 0 : index
    %4 = vector.load %arg6[%c0_1, %c0_2] : memref<1x32xf32, #tpu.memory_space<vmem>>, vector<1x32xf32>
    %c0_i32 = arith.constant 0 : i32
    %5 = arith.addi %2, %c0_i32 : i32
    %c0_i32_3 = arith.constant 0 : i32
    %6 = arith.addi %5, %c0_i32_3 : i32
    %7 = arith.index_cast %6 : i32 to index
    %8 = memref.load %arg2[%7] : memref<64xi32, #tpu.memory_space<smem>>
    %c0_i32_4 = arith.constant 0 : i32
    %c0_i32_5 = arith.constant 0 : i32
    %9 = tpu.memref_slice %arg3[%8, %c0_i32_5] : memref<64x32xf32, #tpu.memory_space<any>> -> memref<1x32xf32, #tpu.memory_space<any>>
    %c0_i32_6 = arith.constant 0 : i32
    %c0_i32_7 = arith.constant 0 : i32
    %10 = tpu.memref_slice %arg8[%c0_i32_6, %c0_i32_7] : memref<16x32xf32, #tpu.memory_space<vmem>> -> memref<1x32xf32, #tpu.memory_space<vmem>>
    %11 = tpu.memref_slice %arg9[%c0_i32_4] : memref<2x!tpu.dma_semaphore, #tpu.memory_space<semaphore_mem>> -> memref<1x!tpu.dma_semaphore, #tpu.memory_space<semaphore_mem>>
    %12 = tpu.memref_squeeze %11 : memref<1x!tpu.dma_semaphore, #tpu.memory_space<semaphore_mem>> -> memref<!tpu.dma_semaphore, #tpu.memory_space<semaphore_mem>>
    tpu.enqueue_dma source(%9 : memref<1x32xf32, #tpu.memory_space<any>>) target(%10 : memref<1x32xf32, #tpu.memory_space<vmem>>) target_semaphore(%12 : memref<!tpu.dma_semaphore, #tpu.memory_space<semaphore_mem>>)
    %c0_i32_8 = arith.constant 0 : i32
    %13 = arith.addi %2, %c0_i32_8 : i32
    %c1_i32 = arith.constant 1 : i32
    %14 = arith.addi %13, %c1_i32 : i32
    %15 = arith.index_cast %14 : i32 to index
    %16 = memref.load %arg2[%15] : memref<64xi32, #tpu.memory_space<smem>>
    %c0_i32_9 = arith.constant 0 : i32
    %c0_i32_10 = arith.constant 0 : i32
    %17 = tpu.memref_slice %arg3[%16, %c0_i32_10] : memref<64x32xf32, #tpu.memory_space<any>> -> memref<1x32xf32, #tpu.memory_space<any>>
    %c1_i32_11 = arith.constant 1 : i32
    %c0_i32_12 = arith.constant 0 : i32
    %18 = tpu.memref_slice %arg8[%c1_i32_11, %c0_i32_12] : memref<16x32xf32, #tpu.memory_space<vmem>> -> memref<1x32xf32, #tpu.memory_space<vmem>>
    %19 = tpu.memref_slice %arg9[%c0_i32_9] : memref<2x!tpu.dma_semaphore, #tpu.memory_space<semaphore_mem>> -> memref<1x!tpu.dma_semaphore, #tpu.memory_space<semaphore_mem>>
    %20 = tpu.memref_squeeze %19 : memref<1x!tpu.dma_semaphore, #tpu.memory_space<semaphore_mem>> -> memref<!tpu.dma_semaphore, #tpu.memory_space<semaphore_mem>>
    tpu.enqueue_dma source(%17 : memref<1x32xf32, #tpu.memory_space<any>>) target(%18 : memref<1x32xf32, #tpu.memory_space<vmem>>) target_semaphore(%20 : memref<!tpu.dma_semaphore, #tpu.memory_space<semaphore_mem>>)
    %c0_i32_13 = arith.constant 0 : i32
    %21 = arith.addi %2, %c0_i32_13 : i32
    %c2_i32 = arith.constant 2 : i32
    %22 = arith.addi %21, %c2_i32 : i32
    %23 = arith.index_cast %22 : i32 to index
    %24 = memref.load %arg2[%23] : memref<64xi32, #tpu.memory_space<smem>>
    %c0_i32_14 = arith.constant 0 : i32
    %c0_i32_15 = arith.constant 0 : i32
    %25 = tpu.memref_slice %arg3[%24, %c0_i32_15] : memref<64x32xf32, #tpu.memory_space<any>> -> memref<1x32xf32, #tpu.memory_space<any>>
    %c2_i32_16 = arith.constant 2 : i32
    %c0_i32_17 = arith.constant 0 : i32
    %26 = tpu.memref_slice %arg8[%c2_i32_16, %c0_i32_17] : memref<16x32xf32, #tpu.memory_space<vmem>> -> memref<1x32xf32, #tpu.memory_space<vmem>>
    %27 = tpu.memref_slice %arg9[%c0_i32_14] : memref<2x!tpu.dma_semaphore, #tpu.memory_space<semaphore_mem>> -> memref<1x!tpu.dma_semaphore, #tpu.memory_space<semaphore_mem>>
    %28 = tpu.memref_squeeze %27 : memref<1x!tpu.dma_semaphore, #tpu.memory_space<semaphore_mem>> -> memref<!tpu.dma_semaphore, #tpu.memory_space<semaphore_mem>>
    tpu.enqueue_dma source(%25 : memref<1x32xf32, #tpu.memory_space<any>>) target(%26 : memref<1x32xf32, #tpu.memory_space<vmem>>) target_semaphore(%28 : memref<!tpu.dma_semaphore, #tpu.memory_space<semaphore_mem>>)
    %c0_i32_18 = arith.constant 0 : i32
    %29 = arith.addi %2, %c0_i32_18 : i32
    %c3_i32 = arith.constant 3 : i32
    %30 = arith.addi %29, %c3_i32 : i32
    %31 = arith.index_cast %30 : i32 to index
    %32 = memref.load %arg2[%31] : memref<64xi32, #tpu.memory_space<smem>>
    %c0_i32_19 = arith.constant 0 : i32
    %c0_i32_20 = arith.constant 0 : i32
    %33 = tpu.memref_slice %arg3[%32, %c0_i32_20] : memref<64x32xf32, #tpu.memory_space<any>> -> memref<1x32xf32, #tpu.memory_space<any>>
    %c3_i32_21 = arith.constant 3 : i32
    %c0_i32_22 = arith.constant 0 : i32
    %34 = tpu.memref_slice %arg8[%c3_i32_21, %c0_i32_22] : memref<16x32xf32, #tpu.memory_space<vmem>> -> memref<1x32xf32, #tpu.memory_space<vmem>>
    %35 = tpu.memref_slice %arg9[%c0_i32_19] : memref<2x!tpu.dma_semaphore, #tpu.memory_space<semaphore_mem>> -> memref<1x!tpu.dma_semaphore, #tpu.memory_space<semaphore_mem>>
    %36 = tpu.memref_squeeze %35 : memref<1x!tpu.dma_semaphore, #tpu.memory_space<semaphore_mem>> -> memref<!tpu.dma_semaphore, #tpu.memory_space<semaphore_mem>>
    tpu.enqueue_dma source(%33 : memref<1x32xf32, #tpu.memory_space<any>>) target(%34 : memref<1x32xf32, #tpu.memory_space<vmem>>) target_semaphore(%36 : memref<!tpu.dma_semaphore, #tpu.memory_space<semaphore_mem>>)
    %c0_i32_23 = arith.constant 0 : i32
    %37 = arith.addi %2, %c0_i32_23 : i32
    %c4_i32 = arith.constant 4 : i32
    %38 = arith.addi %37, %c4_i32 : i32
    %39 = arith.index_cast %38 : i32 to index
    %40 = memref.load %arg2[%39] : memref<64xi32, #tpu.memory_space<smem>>
    %c0_i32_24 = arith.constant 0 : i32
    %c0_i32_25 = arith.constant 0 : i32
    %41 = tpu.memref_slice %arg3[%40, %c0_i32_25] : memref<64x32xf32, #tpu.memory_space<any>> -> memref<1x32xf32, #tpu.memory_space<any>>
    %c4_i32_26 = arith.constant 4 : i32
    %c0_i32_27 = arith.constant 0 : i32
    %42 = tpu.memref_slice %arg8[%c4_i32_26, %c0_i32_27] : memref<16x32xf32, #tpu.memory_space<vmem>> -> memref<1x32xf32, #tpu.memory_space<vmem>>
    %43 = tpu.memref_slice %arg9[%c0_i32_24] : memref<2x!tpu.dma_semaphore, #tpu.memory_space<semaphore_mem>> -> memref<1x!tpu.dma_semaphore, #tpu.memory_space<semaphore_mem>>
    %44 = tpu.memref_squeeze %43 : memref<1x!tpu.dma_semaphore, #tpu.memory_space<semaphore_mem>> -> memref<!tpu.dma_semaphore, #tpu.memory_space<semaphore_mem>>
    tpu.enqueue_dma source(%41 : memref<1x32xf32, #tpu.memory_space<any>>) target(%42 : memref<1x32xf32, #tpu.memory_space<vmem>>) target_semaphore(%44 : memref<!tpu.dma_semaphore, #tpu.memory_space<semaphore_mem>>)
    %c0_i32_28 = arith.constant 0 : i32
    %45 = arith.addi %2, %c0_i32_28 : i32
    %c5_i32 = arith.constant 5 : i32
    %46 = arith.addi %45, %c5_i32 : i32
    %47 = arith.index_cast %46 : i32 to index
    %48 = memref.load %arg2[%47] : memref<64xi32, #tpu.memory_space<smem>>
    %c0_i32_29 = arith.constant 0 : i32
    %c0_i32_30 = arith.constant 0 : i32
    %49 = tpu.memref_slice %arg3[%48, %c0_i32_30] : memref<64x32xf32, #tpu.memory_space<any>> -> memref<1x32xf32, #tpu.memory_space<any>>
    %c5_i32_31 = arith.constant 5 : i32
    %c0_i32_32 = arith.constant 0 : i32
    %50 = tpu.memref_slice %arg8[%c5_i32_31, %c0_i32_32] : memref<16x32xf32, #tpu.memory_space<vmem>> -> memref<1x32xf32, #tpu.memory_space<vmem>>
    %51 = tpu.memref_slice %arg9[%c0_i32_29] : memref<2x!tpu.dma_semaphore, #tpu.memory_space<semaphore_mem>> -> memref<1x!tpu.dma_semaphore, #tpu.memory_space<semaphore_mem>>
    %52 = tpu.memref_squeeze %51 : memref<1x!tpu.dma_semaphore, #tpu.memory_space<semaphore_mem>> -> memref<!tpu.dma_semaphore, #tpu.memory_space<semaphore_mem>>
    tpu.enqueue_dma source(%49 : memref<1x32xf32, #tpu.memory_space<any>>) target(%50 : memref<1x32xf32, #tpu.memory_space<vmem>>) target_semaphore(%52 : memref<!tpu.dma_semaphore, #tpu.memory_space<semaphore_mem>>)
    %c0_i32_33 = arith.constant 0 : i32
    %53 = arith.addi %2, %c0_i32_33 : i32
    %c6_i32 = arith.constant 6 : i32
    %54 = arith.addi %53, %c6_i32 : i32
    %55 = arith.index_cast %54 : i32 to index
    %56 = memref.load %arg2[%55] : memref<64xi32, #tpu.memory_space<smem>>
    %c0_i32_34 = arith.constant 0 : i32
    %c0_i32_35 = arith.constant 0 : i32
    %57 = tpu.memref_slice %arg3[%56, %c0_i32_35] : memref<64x32xf32, #tpu.memory_space<any>> -> memref<1x32xf32, #tpu.memory_space<any>>
    %c6_i32_36 = arith.constant 6 : i32
    %c0_i32_37 = arith.constant 0 : i32
    %58 = tpu.memref_slice %arg8[%c6_i32_36, %c0_i32_37] : memref<16x32xf32, #tpu.memory_space<vmem>> -> memref<1x32xf32, #tpu.memory_space<vmem>>
    %59 = tpu.memref_slice %arg9[%c0_i32_34] : memref<2x!tpu.dma_semaphore, #tpu.memory_space<semaphore_mem>> -> memref<1x!tpu.dma_semaphore, #tpu.memory_space<semaphore_mem>>
    %60 = tpu.memref_squeeze %59 : memref<1x!tpu.dma_semaphore, #tpu.memory_space<semaphore_mem>> -> memref<!tpu.dma_semaphore, #tpu.memory_space<semaphore_mem>>
    tpu.enqueue_dma source(%57 : memref<1x32xf32, #tpu.memory_space<any>>) target(%58 : memref<1x32xf32, #tpu.memory_space<vmem>>) target_semaphore(%60 : memref<!tpu.dma_semaphore, #tpu.memory_space<semaphore_mem>>)
    %c0_i32_38 = arith.constant 0 : i32
    %61 = arith.addi %2, %c0_i32_38 : i32
    %c7_i32 = arith.constant 7 : i32
    %62 = arith.addi %61, %c7_i32 : i32
    %63 = arith.index_cast %62 : i32 to index
    %64 = memref.load %arg2[%63] : memref<64xi32, #tpu.memory_space<smem>>
    %c0_i32_39 = arith.constant 0 : i32
    %c0_i32_40 = arith.constant 0 : i32
    %65 = tpu.memref_slice %arg3[%64, %c0_i32_40] : memref<64x32xf32, #tpu.memory_space<any>> -> memref<1x32xf32, #tpu.memory_space<any>>
    %c7_i32_41 = arith.constant 7 : i32
    %c0_i32_42 = arith.constant 0 : i32
    %66 = tpu.memref_slice %arg8[%c7_i32_41, %c0_i32_42] : memref<16x32xf32, #tpu.memory_space<vmem>> -> memref<1x32xf32, #tpu.memory_space<vmem>>
    %67 = tpu.memref_slice %arg9[%c0_i32_39] : memref<2x!tpu.dma_semaphore, #tpu.memory_space<semaphore_mem>> -> memref<1x!tpu.dma_semaphore, #tpu.memory_space<semaphore_mem>>
    %68 = tpu.memref_squeeze %67 : memref<1x!tpu.dma_semaphore, #tpu.memory_space<semaphore_mem>> -> memref<!tpu.dma_semaphore, #tpu.memory_space<semaphore_mem>>
    tpu.enqueue_dma source(%65 : memref<1x32xf32, #tpu.memory_space<any>>) target(%66 : memref<1x32xf32, #tpu.memory_space<vmem>>) target_semaphore(%68 : memref<!tpu.dma_semaphore, #tpu.memory_space<semaphore_mem>>)
    %c8_i32 = arith.constant 8 : i32
    %69 = arith.addi %2, %c8_i32 : i32
    %c0_i32_43 = arith.constant 0 : i32
    %70 = arith.addi %69, %c0_i32_43 : i32
    %71 = arith.index_cast %70 : i32 to index
    %72 = memref.load %arg2[%71] : memref<64xi32, #tpu.memory_space<smem>>
    %c1_i32_44 = arith.constant 1 : i32
    %c0_i32_45 = arith.constant 0 : i32
    %73 = tpu.memref_slice %arg3[%72, %c0_i32_45] : memref<64x32xf32, #tpu.memory_space<any>> -> memref<1x32xf32, #tpu.memory_space<any>>
    %c8_i32_46 = arith.constant 8 : i32
    %c0_i32_47 = arith.constant 0 : i32
    %74 = tpu.memref_slice %arg8[%c8_i32_46, %c0_i32_47] : memref<16x32xf32, #tpu.memory_space<vmem>> -> memref<1x32xf32, #tpu.memory_space<vmem>>
    %75 = tpu.memref_slice %arg9[%c1_i32_44] : memref<2x!tpu.dma_semaphore, #tpu.memory_space<semaphore_mem>> -> memref<1x!tpu.dma_semaphore, #tpu.memory_space<semaphore_mem>>
    %76 = tpu.memref_squeeze %75 : memref<1x!tpu.dma_semaphore, #tpu.memory_space<semaphore_mem>> -> memref<!tpu.dma_semaphore, #tpu.memory_space<semaphore_mem>>
    tpu.enqueue_dma source(%73 : memref<1x32xf32, #tpu.memory_space<any>>) target(%74 : memref<1x32xf32, #tpu.memory_space<vmem>>) target_semaphore(%76 : memref<!tpu.dma_semaphore, #tpu.memory_space<semaphore_mem>>)
    %c8_i32_48 = arith.constant 8 : i32
    %77 = arith.addi %2, %c8_i32_48 : i32
    %c1_i32_49 = arith.constant 1 : i32
    %78 = arith.addi %77, %c1_i32_49 : i32
    %79 = arith.index_cast %78 : i32 to index
    %80 = memref.load %arg2[%79] : memref<64xi32, #tpu.memory_space<smem>>
    %c1_i32_50 = arith.constant 1 : i32
    %c0_i32_51 = arith.constant 0 : i32
    %81 = tpu.memref_slice %arg3[%80, %c0_i32_51] : memref<64x32xf32, #tpu.memory_space<any>> -> memref<1x32xf32, #tpu.memory_space<any>>
    %c9_i32 = arith.constant 9 : i32
    %c0_i32_52 = arith.constant 0 : i32
    %82 = tpu.memref_slice %arg8[%c9_i32, %c0_i32_52] : memref<16x32xf32, #tpu.memory_space<vmem>> -> memref<1x32xf32, #tpu.memory_space<vmem>>
    %83 = tpu.memref_slice %arg9[%c1_i32_50] : memref<2x!tpu.dma_semaphore, #tpu.memory_space<semaphore_mem>> -> memref<1x!tpu.dma_semaphore, #tpu.memory_space<semaphore_mem>>
    %84 = tpu.memref_squeeze %83 : memref<1x!tpu.dma_semaphore, #tpu.memory_space<semaphore_mem>> -> memref<!tpu.dma_semaphore, #tpu.memory_space<semaphore_mem>>
    tpu.enqueue_dma source(%81 : memref<1x32xf32, #tpu.memory_space<any>>) target(%82 : memref<1x32xf32, #tpu.memory_space<vmem>>) target_semaphore(%84 : memref<!tpu.dma_semaphore, #tpu.memory_space<semaphore_mem>>)
    %c8_i32_53 = arith.constant 8 : i32
    %85 = arith.addi %2, %c8_i32_53 : i32
    %c2_i32_54 = arith.constant 2 : i32
    %86 = arith.addi %85, %c2_i32_54 : i32
    %87 = arith.index_cast %86 : i32 to index
    %88 = memref.load %arg2[%87] : memref<64xi32, #tpu.memory_space<smem>>
    %c1_i32_55 = arith.constant 1 : i32
    %c0_i32_56 = arith.constant 0 : i32
    %89 = tpu.memref_slice %arg3[%88, %c0_i32_56] : memref<64x32xf32, #tpu.memory_space<any>> -> memref<1x32xf32, #tpu.memory_space<any>>
    %c10_i32 = arith.constant 10 : i32
    %c0_i32_57 = arith.constant 0 : i32
    %90 = tpu.memref_slice %arg8[%c10_i32, %c0_i32_57] : memref<16x32xf32, #tpu.memory_space<vmem>> -> memref<1x32xf32, #tpu.memory_space<vmem>>
    %91 = tpu.memref_slice %arg9[%c1_i32_55] : memref<2x!tpu.dma_semaphore, #tpu.memory_space<semaphore_mem>> -> memref<1x!tpu.dma_semaphore, #tpu.memory_space<semaphore_mem>>
    %92 = tpu.memref_squeeze %91 : memref<1x!tpu.dma_semaphore, #tpu.memory_space<semaphore_mem>> -> memref<!tpu.dma_semaphore, #tpu.memory_space<semaphore_mem>>
    tpu.enqueue_dma source(%89 : memref<1x32xf32, #tpu.memory_space<any>>) target(%90 : memref<1x32xf32, #tpu.memory_space<vmem>>) target_semaphore(%92 : memref<!tpu.dma_semaphore, #tpu.memory_space<semaphore_mem>>)
    %c8_i32_58 = arith.constant 8 : i32
    %93 = arith.addi %2, %c8_i32_58 : i32
    %c3_i32_59 = arith.constant 3 : i32
    %94 = arith.addi %93, %c3_i32_59 : i32
    %95 = arith.index_cast %94 : i32 to index
    %96 = memref.load %arg2[%95] : memref<64xi32, #tpu.memory_space<smem>>
    %c1_i32_60 = arith.constant 1 : i32
    %c0_i32_61 = arith.constant 0 : i32
    %97 = tpu.memref_slice %arg3[%96, %c0_i32_61] : memref<64x32xf32, #tpu.memory_space<any>> -> memref<1x32xf32, #tpu.memory_space<any>>
    %c11_i32 = arith.constant 11 : i32
    %c0_i32_62 = arith.constant 0 : i32
    %98 = tpu.memref_slice %arg8[%c11_i32, %c0_i32_62] : memref<16x32xf32, #tpu.memory_space<vmem>> -> memref<1x32xf32, #tpu.memory_space<vmem>>
    %99 = tpu.memref_slice %arg9[%c1_i32_60] : memref<2x!tpu.dma_semaphore, #tpu.memory_space<semaphore_mem>> -> memref<1x!tpu.dma_semaphore, #tpu.memory_space<semaphore_mem>>
    %100 = tpu.memref_squeeze %99 : memref<1x!tpu.dma_semaphore, #tpu.memory_space<semaphore_mem>> -> memref<!tpu.dma_semaphore, #tpu.memory_space<semaphore_mem>>
    tpu.enqueue_dma source(%97 : memref<1x32xf32, #tpu.memory_space<any>>) target(%98 : memref<1x32xf32, #tpu.memory_space<vmem>>) target_semaphore(%100 : memref<!tpu.dma_semaphore, #tpu.memory_space<semaphore_mem>>)
    %c8_i32_63 = arith.constant 8 : i32
    %101 = arith.addi %2, %c8_i32_63 : i32
    %c4_i32_64 = arith.constant 4 : i32
    %102 = arith.addi %101, %c4_i32_64 : i32
    %103 = arith.index_cast %102 : i32 to index
    %104 = memref.load %arg2[%103] : memref<64xi32, #tpu.memory_space<smem>>
    %c1_i32_65 = arith.constant 1 : i32
    %c0_i32_66 = arith.constant 0 : i32
    %105 = tpu.memref_slice %arg3[%104, %c0_i32_66] : memref<64x32xf32, #tpu.memory_space<any>> -> memref<1x32xf32, #tpu.memory_space<any>>
    %c12_i32 = arith.constant 12 : i32
    %c0_i32_67 = arith.constant 0 : i32
    %106 = tpu.memref_slice %arg8[%c12_i32, %c0_i32_67] : memref<16x32xf32, #tpu.memory_space<vmem>> -> memref<1x32xf32, #tpu.memory_space<vmem>>
    %107 = tpu.memref_slice %arg9[%c1_i32_65] : memref<2x!tpu.dma_semaphore, #tpu.memory_space<semaphore_mem>> -> memref<1x!tpu.dma_semaphore, #tpu.memory_space<semaphore_mem>>
    %108 = tpu.memref_squeeze %107 : memref<1x!tpu.dma_semaphore, #tpu.memory_space<semaphore_mem>> -> memref<!tpu.dma_semaphore, #tpu.memory_space<semaphore_mem>>
    tpu.enqueue_dma source(%105 : memref<1x32xf32, #tpu.memory_space<any>>) target(%106 : memref<1x32xf32, #tpu.memory_space<vmem>>) target_semaphore(%108 : memref<!tpu.dma_semaphore, #tpu.memory_space<semaphore_mem>>)
    %c8_i32_68 = arith.constant 8 : i32
    %109 = arith.addi %2, %c8_i32_68 : i32
    %c5_i32_69 = arith.constant 5 : i32
    %110 = arith.addi %109, %c5_i32_69 : i32
    %111 = arith.index_cast %110 : i32 to index
    %112 = memref.load %arg2[%111] : memref<64xi32, #tpu.memory_space<smem>>
    %c1_i32_70 = arith.constant 1 : i32
    %c0_i32_71 = arith.constant 0 : i32
    %113 = tpu.memref_slice %arg3[%112, %c0_i32_71] : memref<64x32xf32, #tpu.memory_space<any>> -> memref<1x32xf32, #tpu.memory_space<any>>
    %c13_i32 = arith.constant 13 : i32
    %c0_i32_72 = arith.constant 0 : i32
    %114 = tpu.memref_slice %arg8[%c13_i32, %c0_i32_72] : memref<16x32xf32, #tpu.memory_space<vmem>> -> memref<1x32xf32, #tpu.memory_space<vmem>>
    %115 = tpu.memref_slice %arg9[%c1_i32_70] : memref<2x!tpu.dma_semaphore, #tpu.memory_space<semaphore_mem>> -> memref<1x!tpu.dma_semaphore, #tpu.memory_space<semaphore_mem>>
    %116 = tpu.memref_squeeze %115 : memref<1x!tpu.dma_semaphore, #tpu.memory_space<semaphore_mem>> -> memref<!tpu.dma_semaphore, #tpu.memory_space<semaphore_mem>>
    tpu.enqueue_dma source(%113 : memref<1x32xf32, #tpu.memory_space<any>>) target(%114 : memref<1x32xf32, #tpu.memory_space<vmem>>) target_semaphore(%116 : memref<!tpu.dma_semaphore, #tpu.memory_space<semaphore_mem>>)
    %c8_i32_73 = arith.constant 8 : i32
    %117 = arith.addi %2, %c8_i32_73 : i32
    %c6_i32_74 = arith.constant 6 : i32
    %118 = arith.addi %117, %c6_i32_74 : i32
    %119 = arith.index_cast %118 : i32 to index
    %120 = memref.load %arg2[%119] : memref<64xi32, #tpu.memory_space<smem>>
    %c1_i32_75 = arith.constant 1 : i32
    %c0_i32_76 = arith.constant 0 : i32
    %121 = tpu.memref_slice %arg3[%120, %c0_i32_76] : memref<64x32xf32, #tpu.memory_space<any>> -> memref<1x32xf32, #tpu.memory_space<any>>
    %c14_i32 = arith.constant 14 : i32
    %c0_i32_77 = arith.constant 0 : i32
    %122 = tpu.memref_slice %arg8[%c14_i32, %c0_i32_77] : memref<16x32xf32, #tpu.memory_space<vmem>> -> memref<1x32xf32, #tpu.memory_space<vmem>>
    %123 = tpu.memref_slice %arg9[%c1_i32_75] : memref<2x!tpu.dma_semaphore, #tpu.memory_space<semaphore_mem>> -> memref<1x!tpu.dma_semaphore, #tpu.memory_space<semaphore_mem>>
    %124 = tpu.memref_squeeze %123 : memref<1x!tpu.dma_semaphore, #tpu.memory_space<semaphore_mem>> -> memref<!tpu.dma_semaphore, #tpu.memory_space<semaphore_mem>>
    tpu.enqueue_dma source(%121 : memref<1x32xf32, #tpu.memory_space<any>>) target(%122 : memref<1x32xf32, #tpu.memory_space<vmem>>) target_semaphore(%124 : memref<!tpu.dma_semaphore, #tpu.memory_space<semaphore_mem>>)
    %c8_i32_78 = arith.constant 8 : i32
    %125 = arith.addi %2, %c8_i32_78 : i32
    %c7_i32_79 = arith.constant 7 : i32
    %126 = arith.addi %125, %c7_i32_79 : i32
    %127 = arith.index_cast %126 : i32 to index
    %128 = memref.load %arg2[%127] : memref<64xi32, #tpu.memory_space<smem>>
    %c1_i32_80 = arith.constant 1 : i32
    %c0_i32_81 = arith.constant 0 : i32
    %129 = tpu.memref_slice %arg3[%128, %c0_i32_81] : memref<64x32xf32, #tpu.memory_space<any>> -> memref<1x32xf32, #tpu.memory_space<any>>
    %c15_i32 = arith.constant 15 : i32
    %c0_i32_82 = arith.constant 0 : i32
    %130 = tpu.memref_slice %arg8[%c15_i32, %c0_i32_82] : memref<16x32xf32, #tpu.memory_space<vmem>> -> memref<1x32xf32, #tpu.memory_space<vmem>>
    %131 = tpu.memref_slice %arg9[%c1_i32_80] : memref<2x!tpu.dma_semaphore, #tpu.memory_space<semaphore_mem>> -> memref<1x!tpu.dma_semaphore, #tpu.memory_space<semaphore_mem>>
    %132 = tpu.memref_squeeze %131 : memref<1x!tpu.dma_semaphore, #tpu.memory_space<semaphore_mem>> -> memref<!tpu.dma_semaphore, #tpu.memory_space<semaphore_mem>>
    tpu.enqueue_dma source(%129 : memref<1x32xf32, #tpu.memory_space<any>>) target(%130 : memref<1x32xf32, #tpu.memory_space<vmem>>) target_semaphore(%132 : memref<!tpu.dma_semaphore, #tpu.memory_space<semaphore_mem>>)
    %c0_i32_83 = arith.constant 0 : i32
    %c0_i32_84 = arith.constant 0 : i32
    %133 = tpu.memref_slice %arg3[%8, %c0_i32_84] : memref<64x32xf32, #tpu.memory_space<any>> -> memref<1x32xf32, #tpu.memory_space<any>>
    %c0_i32_85 = arith.constant 0 : i32
    %c0_i32_86 = arith.constant 0 : i32
    %134 = tpu.memref_slice %arg8[%c0_i32_85, %c0_i32_86] : memref<16x32xf32, #tpu.memory_space<vmem>> -> memref<1x32xf32, #tpu.memory_space<vmem>>
    %135 = tpu.memref_slice %arg9[%c0_i32_83] : memref<2x!tpu.dma_semaphore, #tpu.memory_space<semaphore_mem>> -> memref<1x!tpu.dma_semaphore, #tpu.memory_space<semaphore_mem>>
    %136 = tpu.memref_squeeze %135 : memref<1x!tpu.dma_semaphore, #tpu.memory_space<semaphore_mem>> -> memref<!tpu.dma_semaphore, #tpu.memory_space<semaphore_mem>>
    tpu.wait_dma2 semaphore(%136 : memref<!tpu.dma_semaphore, #tpu.memory_space<semaphore_mem>>) src(%133 : memref<1x32xf32, #tpu.memory_space<any>>) dst(%134 : memref<1x32xf32, #tpu.memory_space<vmem>>)
    %c0_i32_87 = arith.constant 0 : i32
    %c0_i32_88 = arith.constant 0 : i32
    %137 = tpu.memref_slice %arg3[%16, %c0_i32_88] : memref<64x32xf32, #tpu.memory_space<any>> -> memref<1x32xf32, #tpu.memory_space<any>>
    %c1_i32_89 = arith.constant 1 : i32
    %c0_i32_90 = arith.constant 0 : i32
    %138 = tpu.memref_slice %arg8[%c1_i32_89, %c0_i32_90] : memref<16x32xf32, #tpu.memory_space<vmem>> -> memref<1x32xf32, #tpu.memory_space<vmem>>
    %139 = tpu.memref_slice %arg9[%c0_i32_87] : memref<2x!tpu.dma_semaphore, #tpu.memory_space<semaphore_mem>> -> memref<1x!tpu.dma_semaphore, #tpu.memory_space<semaphore_mem>>
    %140 = tpu.memref_squeeze %139 : memref<1x!tpu.dma_semaphore, #tpu.memory_space<semaphore_mem>> -> memref<!tpu.dma_semaphore, #tpu.memory_space<semaphore_mem>>
    tpu.wait_dma2 semaphore(%140 : memref<!tpu.dma_semaphore, #tpu.memory_space<semaphore_mem>>) src(%137 : memref<1x32xf32, #tpu.memory_space<any>>) dst(%138 : memref<1x32xf32, #tpu.memory_space<vmem>>)
    %c0_i32_91 = arith.constant 0 : i32
    %c0_i32_92 = arith.constant 0 : i32
    %141 = tpu.memref_slice %arg3[%24, %c0_i32_92] : memref<64x32xf32, #tpu.memory_space<any>> -> memref<1x32xf32, #tpu.memory_space<any>>
    %c2_i32_93 = arith.constant 2 : i32
    %c0_i32_94 = arith.constant 0 : i32
    %142 = tpu.memref_slice %arg8[%c2_i32_93, %c0_i32_94] : memref<16x32xf32, #tpu.memory_space<vmem>> -> memref<1x32xf32, #tpu.memory_space<vmem>>
    %143 = tpu.memref_slice %arg9[%c0_i32_91] : memref<2x!tpu.dma_semaphore, #tpu.memory_space<semaphore_mem>> -> memref<1x!tpu.dma_semaphore, #tpu.memory_space<semaphore_mem>>
    %144 = tpu.memref_squeeze %143 : memref<1x!tpu.dma_semaphore, #tpu.memory_space<semaphore_mem>> -> memref<!tpu.dma_semaphore, #tpu.memory_space<semaphore_mem>>
    tpu.wait_dma2 semaphore(%144 : memref<!tpu.dma_semaphore, #tpu.memory_space<semaphore_mem>>) src(%141 : memref<1x32xf32, #tpu.memory_space<any>>) dst(%142 : memref<1x32xf32, #tpu.memory_space<vmem>>)
    %c0_i32_95 = arith.constant 0 : i32
    %c0_i32_96 = arith.constant 0 : i32
    %145 = tpu.memref_slice %arg3[%32, %c0_i32_96] : memref<64x32xf32, #tpu.memory_space<any>> -> memref<1x32xf32, #tpu.memory_space<any>>
    %c3_i32_97 = arith.constant 3 : i32
    %c0_i32_98 = arith.constant 0 : i32
    %146 = tpu.memref_slice %arg8[%c3_i32_97, %c0_i32_98] : memref<16x32xf32, #tpu.memory_space<vmem>> -> memref<1x32xf32, #tpu.memory_space<vmem>>
    %147 = tpu.memref_slice %arg9[%c0_i32_95] : memref<2x!tpu.dma_semaphore, #tpu.memory_space<semaphore_mem>> -> memref<1x!tpu.dma_semaphore, #tpu.memory_space<semaphore_mem>>
    %148 = tpu.memref_squeeze %147 : memref<1x!tpu.dma_semaphore, #tpu.memory_space<semaphore_mem>> -> memref<!tpu.dma_semaphore, #tpu.memory_space<semaphore_mem>>
    tpu.wait_dma2 semaphore(%148 : memref<!tpu.dma_semaphore, #tpu.memory_space<semaphore_mem>>) src(%145 : memref<1x32xf32, #tpu.memory_space<any>>) dst(%146 : memref<1x32xf32, #tpu.memory_space<vmem>>)
    %c0_i32_99 = arith.constant 0 : i32
    %c0_i32_100 = arith.constant 0 : i32
    %149 = tpu.memref_slice %arg3[%40, %c0_i32_100] : memref<64x32xf32, #tpu.memory_space<any>> -> memref<1x32xf32, #tpu.memory_space<any>>
    %c4_i32_101 = arith.constant 4 : i32
    %c0_i32_102 = arith.constant 0 : i32
    %150 = tpu.memref_slice %arg8[%c4_i32_101, %c0_i32_102] : memref<16x32xf32, #tpu.memory_space<vmem>> -> memref<1x32xf32, #tpu.memory_space<vmem>>
    %151 = tpu.memref_slice %arg9[%c0_i32_99] : memref<2x!tpu.dma_semaphore, #tpu.memory_space<semaphore_mem>> -> memref<1x!tpu.dma_semaphore, #tpu.memory_space<semaphore_mem>>
    %152 = tpu.memref_squeeze %151 : memref<1x!tpu.dma_semaphore, #tpu.memory_space<semaphore_mem>> -> memref<!tpu.dma_semaphore, #tpu.memory_space<semaphore_mem>>
    tpu.wait_dma2 semaphore(%152 : memref<!tpu.dma_semaphore, #tpu.memory_space<semaphore_mem>>) src(%149 : memref<1x32xf32, #tpu.memory_space<any>>) dst(%150 : memref<1x32xf32, #tpu.memory_space<vmem>>)
    %c0_i32_103 = arith.constant 0 : i32
    %c0_i32_104 = arith.constant 0 : i32
    %153 = tpu.memref_slice %arg3[%48, %c0_i32_104] : memref<64x32xf32, #tpu.memory_space<any>> -> memref<1x32xf32, #tpu.memory_space<any>>
    %c5_i32_105 = arith.constant 5 : i32
    %c0_i32_106 = arith.constant 0 : i32
    %154 = tpu.memref_slice %arg8[%c5_i32_105, %c0_i32_106] : memref<16x32xf32, #tpu.memory_space<vmem>> -> memref<1x32xf32, #tpu.memory_space<vmem>>
    %155 = tpu.memref_slice %arg9[%c0_i32_103] : memref<2x!tpu.dma_semaphore, #tpu.memory_space<semaphore_mem>> -> memref<1x!tpu.dma_semaphore, #tpu.memory_space<semaphore_mem>>
    %156 = tpu.memref_squeeze %155 : memref<1x!tpu.dma_semaphore, #tpu.memory_space<semaphore_mem>> -> memref<!tpu.dma_semaphore, #tpu.memory_space<semaphore_mem>>
    tpu.wait_dma2 semaphore(%156 : memref<!tpu.dma_semaphore, #tpu.memory_space<semaphore_mem>>) src(%153 : memref<1x32xf32, #tpu.memory_space<any>>) dst(%154 : memref<1x32xf32, #tpu.memory_space<vmem>>)
    %c0_i32_107 = arith.constant 0 : i32
    %c0_i32_108 = arith.constant 0 : i32
    %157 = tpu.memref_slice %arg3[%56, %c0_i32_108] : memref<64x32xf32, #tpu.memory_space<any>> -> memref<1x32xf32, #tpu.memory_space<any>>
    %c6_i32_109 = arith.constant 6 : i32
    %c0_i32_110 = arith.constant 0 : i32
    %158 = tpu.memref_slice %arg8[%c6_i32_109, %c0_i32_110] : memref<16x32xf32, #tpu.memory_space<vmem>> -> memref<1x32xf32, #tpu.memory_space<vmem>>
    %159 = tpu.memref_slice %arg9[%c0_i32_107] : memref<2x!tpu.dma_semaphore, #tpu.memory_space<semaphore_mem>> -> memref<1x!tpu.dma_semaphore, #tpu.memory_space<semaphore_mem>>
    %160 = tpu.memref_squeeze %159 : memref<1x!tpu.dma_semaphore, #tpu.memory_space<semaphore_mem>> -> memref<!tpu.dma_semaphore, #tpu.memory_space<semaphore_mem>>
    tpu.wait_dma2 semaphore(%160 : memref<!tpu.dma_semaphore, #tpu.memory_space<semaphore_mem>>) src(%157 : memref<1x32xf32, #tpu.memory_space<any>>) dst(%158 : memref<1x32xf32, #tpu.memory_space<vmem>>)
    %c0_i32_111 = arith.constant 0 : i32
    %c0_i32_112 = arith.constant 0 : i32
    %161 = tpu.memref_slice %arg3[%64, %c0_i32_112] : memref<64x32xf32, #tpu.memory_space<any>> -> memref<1x32xf32, #tpu.memory_space<any>>
    %c7_i32_113 = arith.constant 7 : i32
    %c0_i32_114 = arith.constant 0 : i32
    %162 = tpu.memref_slice %arg8[%c7_i32_113, %c0_i32_114] : memref<16x32xf32, #tpu.memory_space<vmem>> -> memref<1x32xf32, #tpu.memory_space<vmem>>
    %163 = tpu.memref_slice %arg9[%c0_i32_111] : memref<2x!tpu.dma_semaphore, #tpu.memory_space<semaphore_mem>> -> memref<1x!tpu.dma_semaphore, #tpu.memory_space<semaphore_mem>>
    %164 = tpu.memref_squeeze %163 : memref<1x!tpu.dma_semaphore, #tpu.memory_space<semaphore_mem>> -> memref<!tpu.dma_semaphore, #tpu.memory_space<semaphore_mem>>
    tpu.wait_dma2 semaphore(%164 : memref<!tpu.dma_semaphore, #tpu.memory_space<semaphore_mem>>) src(%161 : memref<1x32xf32, #tpu.memory_space<any>>) dst(%162 : memref<1x32xf32, #tpu.memory_space<vmem>>)
    %c0_115 = arith.constant 0 : index
    %c0_116 = arith.constant 0 : index
    %165 = vector.load %arg8[%c0_115, %c0_116] : memref<16x32xf32, #tpu.memory_space<vmem>>, vector<8x32xf32>
    %c0_117 = arith.constant 0 : index
    %c0_118 = arith.constant 0 : index
    %166 = vector.load %arg4[%c0_117, %c0_118] : memref<16x32xf32, #tpu.memory_space<vmem>>, vector<8x32xf32>
    %167 = arith.addf %165, %166 : vector<8x32xf32>
    %cst = arith.constant dense<0.000000e+00> : vector<8xf32>
    %168 = vector.multi_reduction <add>, %167, %cst [1] : vector<8x32xf32> to vector<8xf32>
    %169 = vector.shape_cast %168 : vector<8xf32> to vector<8x1xf32>
    %170 = arith.mulf %167, %167 : vector<8x32xf32>
    %cst_119 = arith.constant dense<0.000000e+00> : vector<8xf32>
    %171 = vector.multi_reduction <add>, %170, %cst_119 [1] : vector<8x32xf32> to vector<8xf32>
    %172 = vector.shape_cast %171 : vector<8xf32> to vector<8x1xf32>
    %cst_120 = arith.constant 3.125000e-02 : f32
    %173 = vector.broadcast %cst_120 : f32 to vector<8x1xf32>
    %174 = arith.mulf %169, %173 : vector<8x1xf32>
    %cst_121 = arith.constant 3.125000e-02 : f32
    %175 = vector.broadcast %cst_121 : f32 to vector<8x1xf32>
    %176 = arith.mulf %172, %175 : vector<8x1xf32>
    %177 = arith.mulf %174, %174 : vector<8x1xf32>
    %178 = arith.subf %176, %177 : vector<8x1xf32>
    %cst_122 = arith.constant 0.000000e+00 : f32
    %179 = vector.broadcast %cst_122 : f32 to vector<8x1xf32>
    %180 = arith.maximumf %178, %179 : vector<8x1xf32>
    %181 = vector.broadcast %174 : vector<8x1xf32> to vector<8x32xf32>
    %182 = arith.subf %167, %181 : vector<8x32xf32>
    %cst_123 = arith.constant 9.99999996E-13 : f32
    %183 = vector.broadcast %cst_123 : f32 to vector<8x1xf32>
    %184 = arith.addf %180, %183 : vector<8x1xf32>
    %185 = math.rsqrt %184 : vector<8x1xf32>
    %186 = vector.broadcast %185 : vector<8x1xf32> to vector<8x32xf32>
    %187 = arith.mulf %182, %186 : vector<8x32xf32>
    %188 = vector.broadcast %3 : vector<1x32xf32> to vector<8x32xf32>
    %189 = arith.mulf %187, %188 : vector<8x32xf32>
    %190 = vector.broadcast %4 : vector<1x32xf32> to vector<8x32xf32>
    %191 = arith.addf %189, %190 : vector<8x32xf32>
    %c0_124 = arith.constant 0 : index
    %c0_125 = arith.constant 0 : index
    %c0_126 = arith.constant 0 : index
    %192 = vector.load %arg7[%c0_124, %c0_125, %c0_126] : memref<1x16x32xf32, #tpu.memory_space<vmem>>, vector<1x8x32xf32>
    %193 = vector.shape_cast %192 : vector<1x8x32xf32> to vector<8x32xf32>
    %194 = vector.shape_cast %191 : vector<8x32xf32> to vector<1x8x32xf32>
    tpu.vector_store %arg7[%c0_124, %c0_125, %c0_126], %194 {strides = array<i32>} : memref<1x16x32xf32, #tpu.memory_space<vmem>>, vector<1x8x32xf32>,
    %c1_i32_127 = arith.constant 1 : i32
    %c0_i32_128 = arith.constant 0 : i32
    %195 = tpu.memref_slice %arg3[%72, %c0_i32_128] : memref<64x32xf32, #tpu.memory_space<any>> -> memref<1x32xf32, #tpu.memory_space<any>>
    %c8_i32_129 = arith.constant 8 : i32
    %c0_i32_130 = arith.constant 0 : i32
    %196 = tpu.memref_slice %arg8[%c8_i32_129, %c0_i32_130] : memref<16x32xf32, #tpu.memory_space<vmem>> -> memref<1x32xf32, #tpu.memory_space<vmem>>
    %197 = tpu.memref_slice %arg9[%c1_i32_127] : memref<2x!tpu.dma_semaphore, #tpu.memory_space<semaphore_mem>> -> memref<1x!tpu.dma_semaphore, #tpu.memory_space<semaphore_mem>>
    %198 = tpu.memref_squeeze %197 : memref<1x!tpu.dma_semaphore, #tpu.memory_space<semaphore_mem>> -> memref<!tpu.dma_semaphore, #tpu.memory_space<semaphore_mem>>
    tpu.wait_dma2 semaphore(%198 : memref<!tpu.dma_semaphore, #tpu.memory_space<semaphore_mem>>) src(%195 : memref<1x32xf32, #tpu.memory_space<any>>) dst(%196 : memref<1x32xf32, #tpu.memory_space<vmem>>)
    %c1_i32_131 = arith.constant 1 : i32
    %c0_i32_132 = arith.constant 0 : i32
    %199 = tpu.memref_slice %arg3[%80, %c0_i32_132] : memref<64x32xf32, #tpu.memory_space<any>> -> memref<1x32xf32, #tpu.memory_space<any>>
    %c9_i32_133 = arith.constant 9 : i32
    %c0_i32_134 = arith.constant 0 : i32
    %200 = tpu.memref_slice %arg8[%c9_i32_133, %c0_i32_134] : memref<16x32xf32, #tpu.memory_space<vmem>> -> memref<1x32xf32, #tpu.memory_space<vmem>>
    %201 = tpu.memref_slice %arg9[%c1_i32_131] : memref<2x!tpu.dma_semaphore, #tpu.memory_space<semaphore_mem>> -> memref<1x!tpu.dma_semaphore, #tpu.memory_space<semaphore_mem>>
    %202 = tpu.memref_squeeze %201 : memref<1x!tpu.dma_semaphore, #tpu.memory_space<semaphore_mem>> -> memref<!tpu.dma_semaphore, #tpu.memory_space<semaphore_mem>>
    tpu.wait_dma2 semaphore(%202 : memref<!tpu.dma_semaphore, #tpu.memory_space<semaphore_mem>>) src(%199 : memref<1x32xf32, #tpu.memory_space<any>>) dst(%200 : memref<1x32xf32, #tpu.memory_space<vmem>>)
    %c1_i32_135 = arith.constant 1 : i32
    %c0_i32_136 = arith.constant 0 : i32
    %203 = tpu.memref_slice %arg3[%88, %c0_i32_136] : memref<64x32xf32, #tpu.memory_space<any>> -> memref<1x32xf32, #tpu.memory_space<any>>
    %c10_i32_137 = arith.constant 10 : i32
    %c0_i32_138 = arith.constant 0 : i32
    %204 = tpu.memref_slice %arg8[%c10_i32_137, %c0_i32_138] : memref<16x32xf32, #tpu.memory_space<vmem>> -> memref<1x32xf32, #tpu.memory_space<vmem>>
    %205 = tpu.memref_slice %arg9[%c1_i32_135] : memref<2x!tpu.dma_semaphore, #tpu.memory_space<semaphore_mem>> -> memref<1x!tpu.dma_semaphore, #tpu.memory_space<semaphore_mem>>
    %206 = tpu.memref_squeeze %205 : memref<1x!tpu.dma_semaphore, #tpu.memory_space<semaphore_mem>> -> memref<!tpu.dma_semaphore, #tpu.memory_space<semaphore_mem>>
    tpu.wait_dma2 semaphore(%206 : memref<!tpu.dma_semaphore, #tpu.memory_space<semaphore_mem>>) src(%203 : memref<1x32xf32, #tpu.memory_space<any>>) dst(%204 : memref<1x32xf32, #tpu.memory_space<vmem>>)
    %c1_i32_139 = arith.constant 1 : i32
    %c0_i32_140 = arith.constant 0 : i32
    %207 = tpu.memref_slice %arg3[%96, %c0_i32_140] : memref<64x32xf32, #tpu.memory_space<any>> -> memref<1x32xf32, #tpu.memory_space<any>>
    %c11_i32_141 = arith.constant 11 : i32
    %c0_i32_142 = arith.constant 0 : i32
    %208 = tpu.memref_slice %arg8[%c11_i32_141, %c0_i32_142] : memref<16x32xf32, #tpu.memory_space<vmem>> -> memref<1x32xf32, #tpu.memory_space<vmem>>
    %209 = tpu.memref_slice %arg9[%c1_i32_139] : memref<2x!tpu.dma_semaphore, #tpu.memory_space<semaphore_mem>> -> memref<1x!tpu.dma_semaphore, #tpu.memory_space<semaphore_mem>>
    %210 = tpu.memref_squeeze %209 : memref<1x!tpu.dma_semaphore, #tpu.memory_space<semaphore_mem>> -> memref<!tpu.dma_semaphore, #tpu.memory_space<semaphore_mem>>
    tpu.wait_dma2 semaphore(%210 : memref<!tpu.dma_semaphore, #tpu.memory_space<semaphore_mem>>) src(%207 : memref<1x32xf32, #tpu.memory_space<any>>) dst(%208 : memref<1x32xf32, #tpu.memory_space<vmem>>)
    %c1_i32_143 = arith.constant 1 : i32
    %c0_i32_144 = arith.constant 0 : i32
    %211 = tpu.memref_slice %arg3[%104, %c0_i32_144] : memref<64x32xf32, #tpu.memory_space<any>> -> memref<1x32xf32, #tpu.memory_space<any>>
    %c12_i32_145 = arith.constant 12 : i32
    %c0_i32_146 = arith.constant 0 : i32
    %212 = tpu.memref_slice %arg8[%c12_i32_145, %c0_i32_146] : memref<16x32xf32, #tpu.memory_space<vmem>> -> memref<1x32xf32, #tpu.memory_space<vmem>>
    %213 = tpu.memref_slice %arg9[%c1_i32_143] : memref<2x!tpu.dma_semaphore, #tpu.memory_space<semaphore_mem>> -> memref<1x!tpu.dma_semaphore, #tpu.memory_space<semaphore_mem>>
    %214 = tpu.memref_squeeze %213 : memref<1x!tpu.dma_semaphore, #tpu.memory_space<semaphore_mem>> -> memref<!tpu.dma_semaphore, #tpu.memory_space<semaphore_mem>>
    tpu.wait_dma2 semaphore(%214 : memref<!tpu.dma_semaphore, #tpu.memory_space<semaphore_mem>>) src(%211 : memref<1x32xf32, #tpu.memory_space<any>>) dst(%212 : memref<1x32xf32, #tpu.memory_space<vmem>>)
    %c1_i32_147 = arith.constant 1 : i32
    %c0_i32_148 = arith.constant 0 : i32
    %215 = tpu.memref_slice %arg3[%112, %c0_i32_148] : memref<64x32xf32, #tpu.memory_space<any>> -> memref<1x32xf32, #tpu.memory_space<any>>
    %c13_i32_149 = arith.constant 13 : i32
    %c0_i32_150 = arith.constant 0 : i32
    %216 = tpu.memref_slice %arg8[%c13_i32_149, %c0_i32_150] : memref<16x32xf32, #tpu.memory_space<vmem>> -> memref<1x32xf32, #tpu.memory_space<vmem>>
    %217 = tpu.memref_slice %arg9[%c1_i32_147] : memref<2x!tpu.dma_semaphore, #tpu.memory_space<semaphore_mem>> -> memref<1x!tpu.dma_semaphore, #tpu.memory_space<semaphore_mem>>
    %218 = tpu.memref_squeeze %217 : memref<1x!tpu.dma_semaphore, #tpu.memory_space<semaphore_mem>> -> memref<!tpu.dma_semaphore, #tpu.memory_space<semaphore_mem>>
    tpu.wait_dma2 semaphore(%218 : memref<!tpu.dma_semaphore, #tpu.memory_space<semaphore_mem>>) src(%215 : memref<1x32xf32, #tpu.memory_space<any>>) dst(%216 : memref<1x32xf32, #tpu.memory_space<vmem>>)
    %c1_i32_151 = arith.constant 1 : i32
    %c0_i32_152 = arith.constant 0 : i32
    %219 = tpu.memref_slice %arg3[%120, %c0_i32_152] : memref<64x32xf32, #tpu.memory_space<any>> -> memref<1x32xf32, #tpu.memory_space<any>>
    %c14_i32_153 = arith.constant 14 : i32
    %c0_i32_154 = arith.constant 0 : i32
    %220 = tpu.memref_slice %arg8[%c14_i32_153, %c0_i32_154] : memref<16x32xf32, #tpu.memory_space<vmem>> -> memref<1x32xf32, #tpu.memory_space<vmem>>
    %221 = tpu.memref_slice %arg9[%c1_i32_151] : memref<2x!tpu.dma_semaphore, #tpu.memory_space<semaphore_mem>> -> memref<1x!tpu.dma_semaphore, #tpu.memory_space<semaphore_mem>>
    %222 = tpu.memref_squeeze %221 : memref<1x!tpu.dma_semaphore, #tpu.memory_space<semaphore_mem>> -> memref<!tpu.dma_semaphore, #tpu.memory_space<semaphore_mem>>
    tpu.wait_dma2 semaphore(%222 : memref<!tpu.dma_semaphore, #tpu.memory_space<semaphore_mem>>) src(%219 : memref<1x32xf32, #tpu.memory_space<any>>) dst(%220 : memref<1x32xf32, #tpu.memory_space<vmem>>)
    %c1_i32_155 = arith.constant 1 : i32
    %c0_i32_156 = arith.constant 0 : i32
    %223 = tpu.memref_slice %arg3[%128, %c0_i32_156] : memref<64x32xf32, #tpu.memory_space<any>> -> memref<1x32xf32, #tpu.memory_space<any>>
    %c15_i32_157 = arith.constant 15 : i32
    %c0_i32_158 = arith.constant 0 : i32
    %224 = tpu.memref_slice %arg8[%c15_i32_157, %c0_i32_158] : memref<16x32xf32, #tpu.memory_space<vmem>> -> memref<1x32xf32, #tpu.memory_space<vmem>>
    %225 = tpu.memref_slice %arg9[%c1_i32_155] : memref<2x!tpu.dma_semaphore, #tpu.memory_space<semaphore_mem>> -> memref<1x!tpu.dma_semaphore, #tpu.memory_space<semaphore_mem>>
    %226 = tpu.memref_squeeze %225 : memref<1x!tpu.dma_semaphore, #tpu.memory_space<semaphore_mem>> -> memref<!tpu.dma_semaphore, #tpu.memory_space<semaphore_mem>>
    tpu.wait_dma2 semaphore(%226 : memref<!tpu.dma_semaphore, #tpu.memory_space<semaphore_mem>>) src(%223 : memref<1x32xf32, #tpu.memory_space<any>>) dst(%224 : memref<1x32xf32, #tpu.memory_space<vmem>>)
    %c8 = arith.constant 8 : index
    %c0_159 = arith.constant 0 : index
    %227 = vector.load %arg8[%c8, %c0_159] : memref<16x32xf32, #tpu.memory_space<vmem>>, vector<8x32xf32>
    %c8_160 = arith.constant 8 : index
    %c0_161 = arith.constant 0 : index
    %228 = vector.load %arg4[%c8_160, %c0_161] : memref<16x32xf32, #tpu.memory_space<vmem>>, vector<8x32xf32>
    %229 = arith.addf %227, %228 : vector<8x32xf32>
    %cst_162 = arith.constant dense<0.000000e+00> : vector<8xf32>
    %230 = vector.multi_reduction <add>, %229, %cst_162 [1] : vector<8x32xf32> to vector<8xf32>
    %231 = vector.shape_cast %230 : vector<8xf32> to vector<8x1xf32>
    %232 = arith.mulf %229, %229 : vector<8x32xf32>
    %cst_163 = arith.constant dense<0.000000e+00> : vector<8xf32>
    %233 = vector.multi_reduction <add>, %232, %cst_163 [1] : vector<8x32xf32> to vector<8xf32>
    %234 = vector.shape_cast %233 : vector<8xf32> to vector<8x1xf32>
    %cst_164 = arith.constant 3.125000e-02 : f32
    %235 = vector.broadcast %cst_164 : f32 to vector<8x1xf32>
    %236 = arith.mulf %231, %235 : vector<8x1xf32>
    %cst_165 = arith.constant 3.125000e-02 : f32
    %237 = vector.broadcast %cst_165 : f32 to vector<8x1xf32>
    %238 = arith.mulf %234, %237 : vector<8x1xf32>
    %239 = arith.mulf %236, %236 : vector<8x1xf32>
    %240 = arith.subf %238, %239 : vector<8x1xf32>
    %cst_166 = arith.constant 0.000000e+00 : f32
    %241 = vector.broadcast %cst_166 : f32 to vector<8x1xf32>
    %242 = arith.maximumf %240, %241 : vector<8x1xf32>
    %243 = vector.broadcast %236 : vector<8x1xf32> to vector<8x32xf32>
    %244 = arith.subf %229, %243 : vector<8x32xf32>
    %cst_167 = arith.constant 9.99999996E-13 : f32
    %245 = vector.broadcast %cst_167 : f32 to vector<8x1xf32>
    %246 = arith.addf %242, %245 : vector<8x1xf32>
    %247 = math.rsqrt %246 : vector<8x1xf32>
    %248 = vector.broadcast %247 : vector<8x1xf32> to vector<8x32xf32>
    %249 = arith.mulf %244, %248 : vector<8x32xf32>
    %250 = vector.broadcast %3 : vector<1x32xf32> to vector<8x32xf32>
    %251 = arith.mulf %249, %250 : vector<8x32xf32>
    %252 = vector.broadcast %4 : vector<1x32xf32> to vector<8x32xf32>
    %253 = arith.addf %251, %252 : vector<8x32xf32>
    %c0_168 = arith.constant 0 : index
    %c8_169 = arith.constant 8 : index
    %c0_170 = arith.constant 0 : index
    %254 = vector.load %arg7[%c0_168, %c8_169, %c0_170] : memref<1x16x32xf32, #tpu.memory_space<vmem>>, vector<1x8x32xf32>
    %255 = vector.shape_cast %254 : vector<1x8x32xf32> to vector<8x32xf32>
    %256 = vector.shape_cast %253 : vector<8x32xf32> to vector<1x8x32xf32>
    tpu.vector_store %arg7[%c0_168, %c8_169, %c0_170], %256 {strides = array<i32>} : memref<1x16x32xf32, #tpu.memory_space<vmem>>, vector<1x8x32xf32>,
    return
  }
  func.func @transform_1(%arg0: i32, %arg1: i32, %arg2: memref<64xi32, #tpu.memory_space<smem>>) -> (i32, i32) {
    %c0_i32 = arith.constant 0 : i32
    %c0_i32_0 = arith.constant 0 : i32
    return %arg0, %c0_i32 : i32, i32
  }
  func.func @transform_2(%arg0: i32, %arg1: i32, %arg2: memref<64xi32, #tpu.memory_space<smem>>) -> (i32, i32) {
    %c0_i32 = arith.constant 0 : i32
    %c0_i32_0 = arith.constant 0 : i32
    %c0_i32_1 = arith.constant 0 : i32
    return %c0_i32, %c0_i32_0 : i32, i32
  }
  func.func @transform_3(%arg0: i32, %arg1: i32, %arg2: memref<64xi32, #tpu.memory_space<smem>>) -> (i32, i32) {
    %c0_i32 = arith.constant 0 : i32
    %c0_i32_0 = arith.constant 0 : i32
    %c0_i32_1 = arith.constant 0 : i32
    return %c0_i32, %c0_i32_0 : i32, i32
  }
  func.func @transform_4(%arg0: i32, %arg1: i32, %arg2: memref<64xi32, #tpu.memory_space<smem>>) -> (i32, i32, i32) {
    %c0_i32 = arith.constant 0 : i32
    %c0_i32_0 = arith.constant 0 : i32
    return %arg1, %arg0, %c0_i32 : i32, i32, i32
  }
}

</mosaic_0001>

<llo_original>
// kernel: tpu_custom_call.1
$region0: #{tpu_custom_call.1}
  #allocation0 [shape = 'u32[]', space=smem, size = 0x4, offset = 0x4, fixed_abs, tag = 'smem constant byte address 0x4 - core index']
  #allocation1 [shape = 'u32[144,128]{1,0:T(1,128)}', space=vmem, size = 0x12000, scoped, tag = 'internal scratch']
  #allocation2 [shape = 'f32[16,32]{1,0:T(8,128)}', space=vmem, size = 0x2000, scoped, tag = 'scratch operand']
  #allocation3 [shape = 's32[2]{0}', space=sflag, size = 0x8, scoped, tag = 'scratch operand']
  #allocation4 [shape = 's32[1]{0}', space=sflag, size = 0x4, scoped, tag = 'scoped memory for tpu_custom_call.1']
  #allocation5 [shape = 'u8[512]{0}', space=smem, size = 0x200, scoped, tag = 'prefetched SMEM operand 0']
  #allocation8 [shape = 's32[]', space=sflag, size = 0x4, offset = 0, fixed_abs, tag = 'sflag constant byte address 0x0 - dummy sync flag']
  #allocation9 [shape = 's32[]', space=sflag, size = 0x4, offset = 0, fixed_abs, tag = 'sflag constant byte address 0x0 - dummy sync flag']
  #allocation10 [shape = 's32[]', space=sflag, size = 0x4, offset = 0, fixed_abs, tag = 'sflag constant byte address 0x0 - dummy sync flag']
  #allocation11 [shape = 's32[]', space=sflag, size = 0x4, offset = 0, fixed_abs, tag = 'sflag constant byte address 0x0 - dummy sync flag']
  #allocation12 [shape = 's32[]', space=sflag, size = 0x4, offset = 0, fixed_abs, tag = 'sflag constant byte address 0x0 - dummy sync flag']
  #allocation13 [shape = 's32[]', space=sflag, size = 0x4, offset = 0, fixed_abs, tag = 'sflag constant byte address 0x0 - dummy sync flag']
  #allocation14 [shape = 's32[]', space=sflag, size = 0x4, offset = 0, fixed_abs, tag = 'sflag constant byte address 0x0 - dummy sync flag']
  #allocation15 [shape = 's32[]', space=sflag, size = 0x4, offset = 0, fixed_abs, tag = 'sflag constant byte address 0x0 - dummy sync flag']
  #allocation16 [shape = 's32[]', space=sflag, size = 0x4, offset = 0, fixed_abs, tag = 'sflag constant byte address 0x0 - dummy sync flag']
  #allocation17 [shape = 's32[]', space=sflag, size = 0x4, offset = 0, fixed_abs, tag = 'sflag constant byte address 0x0 - dummy sync flag']
  #allocation18 [shape = 's32[]', space=sflag, size = 0x4, offset = 0, fixed_abs, tag = 'sflag constant byte address 0x0 - dummy sync flag']
  #allocation19 [shape = 's32[]', space=sflag, size = 0x4, offset = 0, fixed_abs, tag = 'sflag constant byte address 0x0 - dummy sync flag']
  #allocation20 [shape = 's32[]', space=sflag, size = 0x4, offset = 0, fixed_abs, tag = 'sflag constant byte address 0x0 - dummy sync flag']
  #allocation21 [shape = 's32[]', space=sflag, size = 0x4, offset = 0, fixed_abs, tag = 'sflag constant byte address 0x0 - dummy sync flag']
  #allocation22 [shape = 's32[]', space=sflag, size = 0x4, offset = 0, fixed_abs, tag = 'sflag constant byte address 0x0 - dummy sync flag']
  #allocation23 [shape = 's32[]', space=sflag, size = 0x4, offset = 0, fixed_abs, tag = 'sflag constant byte address 0x0 - dummy sync flag']
  %s0 = inlined_call_operand.vmem [shape: s32[64], index: 0, kind: input, shape index: {}]
  %s1 = inlined_call_operand.vmem [shape: f32[64,32], index: 1, kind: input, shape index: {}]
  %s2 = inlined_call_operand.vmem [shape: f32[32,32], index: 2, kind: input, shape index: {}]
  %s3 = inlined_call_operand.vmem [shape: f32[1,32], index: 3, kind: input, shape index: {}]
  %s4 = inlined_call_operand.vmem [shape: f32[1,32], index: 4, kind: input, shape index: {}]
  %s5 = inlined_call_operand.hbm [shape: f32[2,32,32], index: 5, kind: output, shape index: {}]
  %s6 = sld [smem:[#allocation0]]
  $region525: #{tpu_custom_call.1} parent=0
    _
  %s8 = ssub.s32 1, %s6
  %s9 = scalar_select 0, %s8, %s6
  %s10 = sshll.u32 %s0, 4
  %s11 = int_to_ptr.vmem [resolvable:$true] %s10
  %13 = dma.vmem_to_smem %s11, 16, [#allocation5], [#allocation4]
  %14 = dma.done [#allocation4], 16
  %15 = sfence
  $region1: #{tpu_custom_call.1} parent=0
    #allocation6 [shape = 'u8[16384]{0}', space=vmem, size = 0x4000, scoped, tag = 'output window, operand 0']
    #allocation7 [shape = 's32[2]{0}', space=sflag, size = 0x8, scoped, tag = 'scoped memory for tpu_custom_call.1']
    %16 = vsyncpa [#allocation7], 0
    %s17 = scalar_lea.sflag [#allocation7], 1
    %18 = vsyncpa %s17, 0
    loop: start=0, step=1, limit=6
    $region2: #{tpu_custom_call.1} parent=1 // loop_pre_header
      _
    $region3: #{tpu_custom_call.1} parent=1 // loop_header
      %s20 = sphi 0, %s24
      %p21 = scmp.ge.s32.totalorder %s20, 6
      %s27 = sphi 0, %s39
      %s28 = sphi 0, %s35
      %s29 = sphi 0, %s27
      %s30 = sphi 0, %s28
      %s31 = sphi 0, %s29
      %s32 = sphi 0, %s30
      %s42 = sphi 0, %s44
      %s45 = sphi 0, %s42
      %s46 = sphi 0, %s45
      %s62 = sphi 0, %s46
      %s66 = sphi 0, %s66
      %s68 = sphi 0, %s66
      %s69 = sphi 0, %s68
      %s83 = sphi 0, %s69
      %s87 = sphi 0, %s87
      %s89 = sphi 0, %s87
      %s90 = sphi 0, %s89
      %s104 = sphi 0, %s90
      %s112 = sphi 0, %s114
      %s115 = sphi 0, %s112
      %s116 = sphi 0, %s115
      %s132 = sphi 0, %s116
    $region4: #{tpu_custom_call.1} parent=1 // loop_header_branch
      %23 = sbr.rel (%p21) target = $region8
    $region5: #{tpu_custom_call.1} parent=1 // loop_body
      %s25 = ssub.s32 %s20, 1
      %s26 = ssub.s32 %s20, 2
      %s33 = sadd.s32 1, %s28
      %p34 = scmp.ge.s32.totalorder %s33, 2
      %s35 = scalar_select %p34, 0, %s33
      %s36 = sadd.s32 1, %s27
      %s37 = scalar_select %p34, %s36, %s27
      %p38 = scmp.ge.s32.totalorder %s37, 2
      %s39 = scalar_select %p38, 0, %s37
      %s40 = ssub.s32 %s27, %s39
      %p41 = scmp.eq.s32.totalorder %s40, 0
      %s43 = sadd.s32 %s42, 1
      %s44 = scalar_select %p41, %s42, %s43
      %p47 = pneg %p41
      %p48 = scmp.eq.s32.totalorder %s20, 3
      %p49 = por %p47, %p48
      %p50 = scmp.ne.s32.totalorder %s42, %s45
      %p51 = scmp.eq.s32.totalorder %s20, 0
      %p52 = por %p50, %p51
      %p53 = scmp.ne.s32.totalorder %s42, %s45
      %p54 = scmp.eq.s32.totalorder %s25, 3
      %p55 = por %p53, %p54
      %p56 = scmp.ne.s32.totalorder %s45, %s46
      %p57 = scmp.eq.s32.totalorder %s25, 0
      %p58 = por %p56, %p57
      %p59 = scmp.ne.s32.totalorder %s45, %s46
      %p60 = scmp.eq.s32.totalorder %s26, 3
      %p61 = por %p59, %p60
      %p63 = scmp.ne.s32.totalorder %s46, %s62
      %p64 = scmp.eq.s32.totalorder %s26, 0
      %p65 = por %p63, %p64
      %s67 = sadd.s32 %s66, 1
      %p70 = scmp.eq.s32.totalorder %s20, 3
      %p71 = scmp.ne.s32.totalorder %s66, %s68
      %p72 = scmp.eq.s32.totalorder %s20, 0
      %p73 = por %p71, %p72
      %p74 = scmp.ne.s32.totalorder %s66, %s68
      %p75 = scmp.eq.s32.totalorder %s25, 3
      %p76 = por %p74, %p75
      %p77 = scmp.ne.s32.totalorder %s68, %s69
      %p78 = scmp.eq.s32.totalorder %s25, 0
      %p79 = por %p77, %p78
      %p80 = scmp.ne.s32.totalorder %s68, %s69
      %p81 = scmp.eq.s32.totalorder %s26, 3
      %p82 = por %p80, %p81
      %p84 = scmp.ne.s32.totalorder %s69, %s83
      %p85 = scmp.eq.s32.totalorder %s26, 0
      %p86 = por %p84, %p85
      %s88 = sadd.s32 %s87, 1
      %p91 = scmp.eq.s32.totalorder %s20, 3
      %p92 = scmp.ne.s32.totalorder %s87, %s89
      %p93 = scmp.eq.s32.totalorder %s20, 0
      %p94 = por %p92, %p93
      %p95 = scmp.ne.s32.totalorder %s87, %s89
      %p96 = scmp.eq.s32.totalorder %s25, 3
      %p97 = por %p95, %p96
      %p98 = scmp.ne.s32.totalorder %s89, %s90
      %p99 = scmp.eq.s32.totalorder %s25, 0
      %p100 = por %p98, %p99
      %p101 = scmp.ne.s32.totalorder %s89, %s90
      %p102 = scmp.eq.s32.totalorder %s26, 3
      %p103 = por %p101, %p102
      %p105 = scmp.ne.s32.totalorder %s90, %s104
      %p106 = scmp.eq.s32.totalorder %s26, 0
      %p107 = por %p105, %p106
      %s108 = ssub.s32 %s28, %s35
      %s109 = ssub.s32 %s27, %s39
      %s110 = sor.u32 %s108, %s109
      %p111 = scmp.eq.s32.totalorder %s110, 0
      %s113 = sadd.s32 %s112, 1
      %s114 = scalar_select %p111, %s112, %s113
      %p117 = pneg %p111
      %p118 = scmp.eq.s32.totalorder %s20, 3
      %p119 = por %p117, %p118
      %p120 = scmp.ne.s32.totalorder %s112, %s115
      %p121 = scmp.eq.s32.totalorder %s20, 0
      %p122 = por %p120, %p121
      %p123 = scmp.ne.s32.totalorder %s112, %s115
      %p124 = scmp.eq.s32.totalorder %s25, 3
      %p125 = por %p123, %p124
      %p126 = scmp.ne.s32.totalorder %s115, %s116
      %p127 = scmp.eq.s32.totalorder %s25, 0
      %p128 = por %p126, %p127
      %p129 = scmp.ne.s32.totalorder %s115, %s116
      %p130 = scmp.eq.s32.totalorder %s26, 3
      %p131 = por %p129, %p130
      %p133 = scmp.ne.s32.totalorder %s116, %s132
      %p134 = scmp.eq.s32.totalorder %s26, 0
      %p135 = por %p133, %p134
      %p136 = scmp.le.s32.totalorder 1, %s20
      %p137 = scmp.lt.s32.totalorder %s20, 5
      %p138 = pnand %p136, %p137
      %p139 = pneg %p138
      // Predicated region
      $region9: #{tpu_custom_call.1} parent=5 // pred_check
        _
      $region10: #{tpu_custom_call.1} parent=5 // pred_check_branch
        %141 = sbr.rel (%p138) target = $region12
      $region11: #{tpu_custom_call.1} parent=5 // pred_region
        %s142 = ssub.s32 %s20, 1
        // Predicated region
        $region13: #{tpu_custom_call.1} parent=11 // pred_check
          %p143 = pneg %p79
        $region14: #{tpu_custom_call.1} parent=11 // pred_check_branch
          %145 = sbr.rel (%p143) target = $region16
        $region15: #{tpu_custom_call.1} parent=11 // pred_region
          _
        $region16: #{tpu_custom_call.1} parent=11 // pred_fallthru
          _
        // Predicated region
        $region17: #{tpu_custom_call.1} parent=11 // pred_check
          %p146 = pneg %p100
        $region18: #{tpu_custom_call.1} parent=11 // pred_check_branch
          %148 = sbr.rel (%p146) target = $region20
        $region19: #{tpu_custom_call.1} parent=11 // pred_region
          _
        $region20: #{tpu_custom_call.1} parent=11 // pred_fallthru
          _
      $region12: #{tpu_custom_call.1} parent=5 // pred_fallthru
        _
      %p149 = scmp.lt.s32.totalorder %s20, 4
      // Predicated region
      $region21: #{tpu_custom_call.1} parent=5 // pred_check
        %p150 = pneg %p149
      $region22: #{tpu_custom_call.1} parent=5 // pred_check_branch
        %152 = sbr.rel (%p150) target = $region24
      $region23: #{tpu_custom_call.1} parent=5 // pred_region
        // Predicated region
        $region25: #{tpu_custom_call.1} parent=23 // pred_check
          %p153 = pneg %p52
        $region26: #{tpu_custom_call.1} parent=23 // pred_check_branch
          %155 = sbr.rel (%p153) target = $region28
        $region27: #{tpu_custom_call.1} parent=23 // pred_region
          %s156 = smul.u32 2, %s27
          %p157 = scmp.lt.s32.totalorder %s156, 3
          %s158 = scalar_select %p157, %s156, 3
          %s159 = smul.addr %s158, 8
          %s160 = scalar_lea.vmem %s2, %s159
          %s161 = smul.u32 2, %s27
        $region28: #{tpu_custom_call.1} parent=23 // pred_fallthru
          _
      $region24: #{tpu_custom_call.1} parent=5 // pred_fallthru
        _
      %p162 = scmp.le.s32.totalorder 1, %s20
      %p163 = scmp.lt.s32.totalorder %s20, 5
      %p164 = pnand %p162, %p163
      %p165 = pneg %p164
      // Predicated region
      $region29: #{tpu_custom_call.1} parent=5 // pred_check
        _
      $region30: #{tpu_custom_call.1} parent=5 // pred_check_branch
        %167 = sbr.rel (%p164) target = $region32
      $region31: #{tpu_custom_call.1} parent=5 // pred_region
        %s168 = ssub.s32 %s20, 1
        %s169 = smul.u32 2, %s29
        %p170 = scmp.lt.s32.totalorder %s169, 3
        %s171 = scalar_select %p170, %s169, 3
        %s172 = smul.addr %s171, 8
        %s173 = scalar_lea.vmem %s2, %s172
        %p174 = pneg %p58
        %p175 = pneg %p55
        %p176 = pneg %p79
        %p177 = pneg %p76
        %p178 = pneg %p100
        %p179 = pneg %p97
        %p180 = pneg %p128
        %p181 = pneg %p125
        %s182 = sand.u32 %s115, 1
        %s183 = scalar_lea.sflag [#allocation7], %s182
        %s184 = sand.u32 %s115, 1
        %s185 = smul.addr %s184, 16
        %s186 = scalar_lea.vmem [#allocation6], %s185
        %s187 = smul.u32 2, %s29
        %p188 = scmp.lt.s32.totalorder %s187, 3
        %s189 = scalar_select %p188, %s187, 3
        %s190 = smul.addr %s189, 8
        %s191 = scalar_lea.vmem %s2, %s190
        %s192 = smul.u32 2, %s29
        %s193 = smul.u32 2, %s29
        %s194 = smul.u32 %s30, 32
        %s195 = smul.u32 %s29, 16
        %s196 = sadd.s32 %s194, %s195
        %v197 = vld [vmem:[%s3] sm:$0x1]
        %v198 = vld [vmem:[%s4] sm:$0x1]
        %s199 = sld [smem:[#allocation5 + %s196]]
        %s200 = scalar_lea.vmem %s1, %s199
        %p202 = scmp.lt.u32.totalorder 1, 8
        %p203 = pneg %p202
        // Predicated region
        $region33: #{tpu_custom_call.1} parent=31 // pred_check
          _
        $region34: #{tpu_custom_call.1} parent=31 // pred_check_branch
          %205 = sbr.rel (%p202) target = $region36
        $region35: #{tpu_custom_call.1} parent=31 // pred_region
          %s220 = sand.u32 1, 7
          %p221 = scmp.eq.s32.totalorder %s220, 0
          %p222 = pneg %p221
          // Predicated region
          $region48: #{tpu_custom_call.1} parent=35 // pred_check
            _
          $region49: #{tpu_custom_call.1} parent=35 // pred_check_branch
            %224 = sbr.rel (%p221) target = $region51
          $region50: #{tpu_custom_call.1} parent=35 // pred_region
            %s225 = sand.u32 1, 7
            %s226 = ssub.s32 1, %s225
            %s227 = scalar_lea.vmem %s200, %s226
            %s228 = ssub.s32 1, %s225
            %s229 = scalar_lea.vmem [#allocation2], %s228
            %s230 = sshllo.u32 0, %s225
            loop: start=0, step=1, limit=1
            $region52: #{tpu_custom_call.1} parent=50 // loop_pre_header
              _
            $region53: #{tpu_custom_call.1} parent=50 // loop_header
              %s232 = sphi 0, %s236
              %p233 = scmp.ge.s32.totalorder %s232, 1
              %s237 = sphi %s227, %s227
              %s238 = sphi %s229, %s229
            $region54: #{tpu_custom_call.1} parent=50 // loop_header_branch
              %235 = sbr.rel (%p233) target = $region58
            $region55: #{tpu_custom_call.1} parent=50 // loop_body
              %v239 = vld [vmem:[%s237] sm:%s230]
              %240 = vst [vmem:[%s238] sm:%s230] %v239
            $region56: #{tpu_custom_call.1} parent=50 // loop_footer
              %s236 = sadd.s32 1, %s232
            $region57: #{tpu_custom_call.1} parent=50 // loop_footer_branch
              %231 = sbr.rel target = $region53
            $region58: #{tpu_custom_call.1} parent=50 // loop_exit
              _
          $region51: #{tpu_custom_call.1} parent=35 // pred_fallthru
            _
        $region36: #{tpu_custom_call.1} parent=31 // pred_fallthru
          _
        // Predicated region
        $region37: #{tpu_custom_call.1} parent=31 // pred_check
          %p206 = pneg %p202
        $region38: #{tpu_custom_call.1} parent=31 // pred_check_branch
          %208 = sbr.rel (%p206) target = $region40
        $region39: #{tpu_custom_call.1} parent=31 // pred_region
          %s209 = sshllo.u32 0, 1
          loop: start=0, step=1, limit=1
          $region41: #{tpu_custom_call.1} parent=39 // loop_pre_header
            _
          $region42: #{tpu_custom_call.1} parent=39 // loop_header
            %s211 = sphi 0, %s215
            %p212 = scmp.ge.s32.totalorder %s211, 1
            %s216 = sphi %s200, %s200
            %s217 = sphi [#allocation2], [#allocation2]
          $region43: #{tpu_custom_call.1} parent=39 // loop_header_branch
            %214 = sbr.rel (%p212) target = $region47
          $region44: #{tpu_custom_call.1} parent=39 // loop_body
            %v218 = vld [vmem:[%s216] sm:%s209]
            %219 = vst [vmem:[%s217] sm:%s209] %v218
          $region45: #{tpu_custom_call.1} parent=39 // loop_footer
            %s215 = sadd.s32 1, %s211
          $region46: #{tpu_custom_call.1} parent=39 // loop_footer_branch
            %210 = sbr.rel target = $region42
          $region47: #{tpu_custom_call.1} parent=39 // loop_exit
            _
        $region40: #{tpu_custom_call.1} parent=31 // pred_fallthru
          _
        // Predicated region
        $region59: #{tpu_custom_call.1} parent=31 // pred_check
          _
        $region60: #{tpu_custom_call.1} parent=31 // pred_check_branch
          %243 = sbr.rel (0) target = $region62
        $region61: #{tpu_custom_call.1} parent=31 // pred_region
          %244 = vsyncadd [#allocation3], 16
        $region62: #{tpu_custom_call.1} parent=31 // pred_fallthru
          _
        %s245 = sadd.s32 %s196, 1
        %s246 = sld [smem:[#allocation5 + %s245]]
        %s247 = scalar_lea.vmem %s1, %s246
        %s248 = scalar_lea.vmem [#allocation2], 1
        %p250 = scmp.lt.u32.totalorder 1, 8
        %p251 = pneg %p250
        // Predicated region
        $region63: #{tpu_custom_call.1} parent=31 // pred_check
          _
        $region64: #{tpu_custom_call.1} parent=31 // pred_check_branch
          %253 = sbr.rel (%p250) target = $region66
        $region65: #{tpu_custom_call.1} parent=31 // pred_region
          %s268 = sand.u32 1, 7
          %p269 = scmp.eq.s32.totalorder %s268, 0
          %p270 = pneg %p269
          // Predicated region
          $region78: #{tpu_custom_call.1} parent=65 // pred_check
            _
          $region79: #{tpu_custom_call.1} parent=65 // pred_check_branch
            %272 = sbr.rel (%p269) target = $region81
          $region80: #{tpu_custom_call.1} parent=65 // pred_region
            %s273 = sand.u32 1, 7
            %s274 = ssub.s32 1, %s273
            %s275 = scalar_lea.vmem %s247, %s274
            %s276 = ssub.s32 1, %s273
            %s277 = scalar_lea.vmem %s248, %s276 [#allocation2]
            %s278 = sshllo.u32 0, %s273
            loop: start=0, step=1, limit=1
            $region82: #{tpu_custom_call.1} parent=80 // loop_pre_header
              _
            $region83: #{tpu_custom_call.1} parent=80 // loop_header
              %s280 = sphi 0, %s284
              %p281 = scmp.ge.s32.totalorder %s280, 1
              %s285 = sphi %s275, %s275
              %s286 = sphi %s277, %s277
            $region84: #{tpu_custom_call.1} parent=80 // loop_header_branch
              %283 = sbr.rel (%p281) target = $region88
            $region85: #{tpu_custom_call.1} parent=80 // loop_body
              %v287 = vld [vmem:[%s285] sm:%s278]
              %288 = vst [vmem:[%s286] sm:%s278] %v287
            $region86: #{tpu_custom_call.1} parent=80 // loop_footer
              %s284 = sadd.s32 1, %s280
            $region87: #{tpu_custom_call.1} parent=80 // loop_footer_branch
              %279 = sbr.rel target = $region83
            $region88: #{tpu_custom_call.1} parent=80 // loop_exit
              _
          $region81: #{tpu_custom_call.1} parent=65 // pred_fallthru
            _
        $region66: #{tpu_custom_call.1} parent=31 // pred_fallthru
          _
        // Predicated region
        $region67: #{tpu_custom_call.1} parent=31 // pred_check
          %p254 = pneg %p250
        $region68: #{tpu_custom_call.1} parent=31 // pred_check_branch
          %256 = sbr.rel (%p254) target = $region70
        $region69: #{tpu_custom_call.1} parent=31 // pred_region
          %s257 = sshllo.u32 0, 1
          loop: start=0, step=1, limit=1
          $region71: #{tpu_custom_call.1} parent=69 // loop_pre_header
            _
          $region72: #{tpu_custom_call.1} parent=69 // loop_header
            %s259 = sphi 0, %s263
            %p260 = scmp.ge.s32.totalorder %s259, 1
            %s264 = sphi %s247, %s247
            %s265 = sphi %s248, %s248
          $region73: #{tpu_custom_call.1} parent=69 // loop_header_branch
            %262 = sbr.rel (%p260) target = $region77
          $region74: #{tpu_custom_call.1} parent=69 // loop_body
            %v266 = vld [vmem:[%s264] sm:%s257]
            %267 = vst [vmem:[%s265] sm:%s257] %v266
          $region75: #{tpu_custom_call.1} parent=69 // loop_footer
            %s263 = sadd.s32 1, %s259
          $region76: #{tpu_custom_call.1} parent=69 // loop_footer_branch
            %258 = sbr.rel target = $region72
          $region77: #{tpu_custom_call.1} parent=69 // loop_exit
            _
        $region70: #{tpu_custom_call.1} parent=31 // pred_fallthru
          _
        // Predicated region
        $region89: #{tpu_custom_call.1} parent=31 // pred_check
          _
        $region90: #{tpu_custom_call.1} parent=31 // pred_check_branch
          %291 = sbr.rel (0) target = $region92
        $region91: #{tpu_custom_call.1} parent=31 // pred_region
          %292 = vsyncadd [#allocation3], 16
        $region92: #{tpu_custom_call.1} parent=31 // pred_fallthru
          _
        %s293 = sadd.s32 %s196, 2
        %s294 = sld [smem:[#allocation5 + %s293]]
        %s295 = scalar_lea.vmem %s1, %s294
        %s296 = scalar_lea.vmem [#allocation2], 2
        %p298 = scmp.lt.u32.totalorder 1, 8
        %p299 = pneg %p298
        // Predicated region
        $region93: #{tpu_custom_call.1} parent=31 // pred_check
          _
        $region94: #{tpu_custom_call.1} parent=31 // pred_check_branch
          %301 = sbr.rel (%p298) target = $region96
        $region95: #{tpu_custom_call.1} parent=31 // pred_region
          %s316 = sand.u32 1, 7
          %p317 = scmp.eq.s32.totalorder %s316, 0
          %p318 = pneg %p317
          // Predicated region
          $region108: #{tpu_custom_call.1} parent=95 // pred_check
            _
          $region109: #{tpu_custom_call.1} parent=95 // pred_check_branch
            %320 = sbr.rel (%p317) target = $region111
          $region110: #{tpu_custom_call.1} parent=95 // pred_region
            %s321 = sand.u32 1, 7
            %s322 = ssub.s32 1, %s321
            %s323 = scalar_lea.vmem %s295, %s322
            %s324 = ssub.s32 1, %s321
            %s325 = scalar_lea.vmem %s296, %s324 [#allocation2]
            %s326 = sshllo.u32 0, %s321
            loop: start=0, step=1, limit=1
            $region112: #{tpu_custom_call.1} parent=110 // loop_pre_header
              _
            $region113: #{tpu_custom_call.1} parent=110 // loop_header
              %s328 = sphi 0, %s332
              %p329 = scmp.ge.s32.totalorder %s328, 1
              %s333 = sphi %s323, %s323
              %s334 = sphi %s325, %s325
            $region114: #{tpu_custom_call.1} parent=110 // loop_header_branch
              %331 = sbr.rel (%p329) target = $region118
            $region115: #{tpu_custom_call.1} parent=110 // loop_body
              %v335 = vld [vmem:[%s333] sm:%s326]
              %336 = vst [vmem:[%s334] sm:%s326] %v335
            $region116: #{tpu_custom_call.1} parent=110 // loop_footer
              %s332 = sadd.s32 1, %s328
            $region117: #{tpu_custom_call.1} parent=110 // loop_footer_branch
              %327 = sbr.rel target = $region113
            $region118: #{tpu_custom_call.1} parent=110 // loop_exit
              _
          $region111: #{tpu_custom_call.1} parent=95 // pred_fallthru
            _
        $region96: #{tpu_custom_call.1} parent=31 // pred_fallthru
          _
        // Predicated region
        $region97: #{tpu_custom_call.1} parent=31 // pred_check
          %p302 = pneg %p298
        $region98: #{tpu_custom_call.1} parent=31 // pred_check_branch
          %304 = sbr.rel (%p302) target = $region100
        $region99: #{tpu_custom_call.1} parent=31 // pred_region
          %s305 = sshllo.u32 0, 1
          loop: start=0, step=1, limit=1
          $region101: #{tpu_custom_call.1} parent=99 // loop_pre_header
            _
          $region102: #{tpu_custom_call.1} parent=99 // loop_header
            %s307 = sphi 0, %s311
            %p308 = scmp.ge.s32.totalorder %s307, 1
            %s312 = sphi %s295, %s295
            %s313 = sphi %s296, %s296
          $region103: #{tpu_custom_call.1} parent=99 // loop_header_branch
            %310 = sbr.rel (%p308) target = $region107
          $region104: #{tpu_custom_call.1} parent=99 // loop_body
            %v314 = vld [vmem:[%s312] sm:%s305]
            %315 = vst [vmem:[%s313] sm:%s305] %v314
          $region105: #{tpu_custom_call.1} parent=99 // loop_footer
            %s311 = sadd.s32 1, %s307
          $region106: #{tpu_custom_call.1} parent=99 // loop_footer_branch
            %306 = sbr.rel target = $region102
          $region107: #{tpu_custom_call.1} parent=99 // loop_exit
            _
        $region100: #{tpu_custom_call.1} parent=31 // pred_fallthru
          _
        // Predicated region
        $region119: #{tpu_custom_call.1} parent=31 // pred_check
          _
        $region120: #{tpu_custom_call.1} parent=31 // pred_check_branch
          %339 = sbr.rel (0) target = $region122
        $region121: #{tpu_custom_call.1} parent=31 // pred_region
          %340 = vsyncadd [#allocation3], 16
        $region122: #{tpu_custom_call.1} parent=31 // pred_fallthru
          _
        %s341 = sadd.s32 %s196, 3
        %s342 = sld [smem:[#allocation5 + %s341]]
        %s343 = scalar_lea.vmem %s1, %s342
        %s344 = scalar_lea.vmem [#allocation2], 3
        %p346 = scmp.lt.u32.totalorder 1, 8
        %p347 = pneg %p346
        // Predicated region
        $region123: #{tpu_custom_call.1} parent=31 // pred_check
          _
        $region124: #{tpu_custom_call.1} parent=31 // pred_check_branch
          %349 = sbr.rel (%p346) target = $region126
        $region125: #{tpu_custom_call.1} parent=31 // pred_region
          %s364 = sand.u32 1, 7
          %p365 = scmp.eq.s32.totalorder %s364, 0
          %p366 = pneg %p365
          // Predicated region
          $region138: #{tpu_custom_call.1} parent=125 // pred_check
            _
          $region139: #{tpu_custom_call.1} parent=125 // pred_check_branch
            %368 = sbr.rel (%p365) target = $region141
          $region140: #{tpu_custom_call.1} parent=125 // pred_region
            %s369 = sand.u32 1, 7
            %s370 = ssub.s32 1, %s369
            %s371 = scalar_lea.vmem %s343, %s370
            %s372 = ssub.s32 1, %s369
            %s373 = scalar_lea.vmem %s344, %s372 [#allocation2]
            %s374 = sshllo.u32 0, %s369
            loop: start=0, step=1, limit=1
            $region142: #{tpu_custom_call.1} parent=140 // loop_pre_header
              _
            $region143: #{tpu_custom_call.1} parent=140 // loop_header
              %s376 = sphi 0, %s380
              %p377 = scmp.ge.s32.totalorder %s376, 1
              %s381 = sphi %s371, %s371
              %s382 = sphi %s373, %s373
            $region144: #{tpu_custom_call.1} parent=140 // loop_header_branch
              %379 = sbr.rel (%p377) target = $region148
            $region145: #{tpu_custom_call.1} parent=140 // loop_body
              %v383 = vld [vmem:[%s381] sm:%s374]
              %384 = vst [vmem:[%s382] sm:%s374] %v383
            $region146: #{tpu_custom_call.1} parent=140 // loop_footer
              %s380 = sadd.s32 1, %s376
            $region147: #{tpu_custom_call.1} parent=140 // loop_footer_branch
              %375 = sbr.rel target = $region143
            $region148: #{tpu_custom_call.1} parent=140 // loop_exit
              _
          $region141: #{tpu_custom_call.1} parent=125 // pred_fallthru
            _
        $region126: #{tpu_custom_call.1} parent=31 // pred_fallthru
          _
        // Predicated region
        $region127: #{tpu_custom_call.1} parent=31 // pred_check
          %p350 = pneg %p346
        $region128: #{tpu_custom_call.1} parent=31 // pred_check_branch
          %352 = sbr.rel (%p350) target = $region130
        $region129: #{tpu_custom_call.1} parent=31 // pred_region
          %s353 = sshllo.u32 0, 1
          loop: start=0, step=1, limit=1
          $region131: #{tpu_custom_call.1} parent=129 // loop_pre_header
            _
          $region132: #{tpu_custom_call.1} parent=129 // loop_header
            %s355 = sphi 0, %s359
            %p356 = scmp.ge.s32.totalorder %s355, 1
            %s360 = sphi %s343, %s343
            %s361 = sphi %s344, %s344
          $region133: #{tpu_custom_call.1} parent=129 // loop_header_branch
            %358 = sbr.rel (%p356) target = $region137
          $region134: #{tpu_custom_call.1} parent=129 // loop_body
            %v362 = vld [vmem:[%s360] sm:%s353]
            %363 = vst [vmem:[%s361] sm:%s353] %v362
          $region135: #{tpu_custom_call.1} parent=129 // loop_footer
            %s359 = sadd.s32 1, %s355
          $region136: #{tpu_custom_call.1} parent=129 // loop_footer_branch
            %354 = sbr.rel target = $region132
          $region137: #{tpu_custom_call.1} parent=129 // loop_exit
            _
        $region130: #{tpu_custom_call.1} parent=31 // pred_fallthru
          _
        // Predicated region
        $region149: #{tpu_custom_call.1} parent=31 // pred_check
          _
        $region150: #{tpu_custom_call.1} parent=31 // pred_check_branch
          %387 = sbr.rel (0) target = $region152
        $region151: #{tpu_custom_call.1} parent=31 // pred_region
          %388 = vsyncadd [#allocation3], 16
        $region152: #{tpu_custom_call.1} parent=31 // pred_fallthru
          _
        %s389 = sadd.s32 %s196, 4
        %s390 = sld [smem:[#allocation5 + %s389]]
        %s391 = scalar_lea.vmem %s1, %s390
        %s392 = scalar_lea.vmem [#allocation2], 4
        %p394 = scmp.lt.u32.totalorder 1, 8
        %p395 = pneg %p394
        // Predicated region
        $region153: #{tpu_custom_call.1} parent=31 // pred_check
          _
        $region154: #{tpu_custom_call.1} parent=31 // pred_check_branch
          %397 = sbr.rel (%p394) target = $region156
        $region155: #{tpu_custom_call.1} parent=31 // pred_region
          %s412 = sand.u32 1, 7
          %p413 = scmp.eq.s32.totalorder %s412, 0
          %p414 = pneg %p413
          // Predicated region
          $region168: #{tpu_custom_call.1} parent=155 // pred_check
            _
          $region169: #{tpu_custom_call.1} parent=155 // pred_check_branch
            %416 = sbr.rel (%p413) target = $region171
          $region170: #{tpu_custom_call.1} parent=155 // pred_region
            %s417 = sand.u32 1, 7
            %s418 = ssub.s32 1, %s417
            %s419 = scalar_lea.vmem %s391, %s418
            %s420 = ssub.s32 1, %s417
            %s421 = scalar_lea.vmem %s392, %s420 [#allocation2]
            %s422 = sshllo.u32 0, %s417
            loop: start=0, step=1, limit=1
            $region172: #{tpu_custom_call.1} parent=170 // loop_pre_header
              _
            $region173: #{tpu_custom_call.1} parent=170 // loop_header
              %s424 = sphi 0, %s428
              %p425 = scmp.ge.s32.totalorder %s424, 1
              %s429 = sphi %s419, %s419
              %s430 = sphi %s421, %s421
            $region174: #{tpu_custom_call.1} parent=170 // loop_header_branch
              %427 = sbr.rel (%p425) target = $region178
            $region175: #{tpu_custom_call.1} parent=170 // loop_body
              %v431 = vld [vmem:[%s429] sm:%s422]
              %432 = vst [vmem:[%s430] sm:%s422] %v431
            $region176: #{tpu_custom_call.1} parent=170 // loop_footer
              %s428 = sadd.s32 1, %s424
            $region177: #{tpu_custom_call.1} parent=170 // loop_footer_branch
              %423 = sbr.rel target = $region173
            $region178: #{tpu_custom_call.1} parent=170 // loop_exit
              _
          $region171: #{tpu_custom_call.1} parent=155 // pred_fallthru
            _
        $region156: #{tpu_custom_call.1} parent=31 // pred_fallthru
          _
        // Predicated region
        $region157: #{tpu_custom_call.1} parent=31 // pred_check
          %p398 = pneg %p394
        $region158: #{tpu_custom_call.1} parent=31 // pred_check_branch
          %400 = sbr.rel (%p398) target = $region160
        $region159: #{tpu_custom_call.1} parent=31 // pred_region
          %s401 = sshllo.u32 0, 1
          loop: start=0, step=1, limit=1
          $region161: #{tpu_custom_call.1} parent=159 // loop_pre_header
            _
          $region162: #{tpu_custom_call.1} parent=159 // loop_header
            %s403 = sphi 0, %s407
            %p404 = scmp.ge.s32.totalorder %s403, 1
            %s408 = sphi %s391, %s391
            %s409 = sphi %s392, %s392
          $region163: #{tpu_custom_call.1} parent=159 // loop_header_branch
            %406 = sbr.rel (%p404) target = $region167
          $region164: #{tpu_custom_call.1} parent=159 // loop_body
            %v410 = vld [vmem:[%s408] sm:%s401]
            %411 = vst [vmem:[%s409] sm:%s401] %v410
          $region165: #{tpu_custom_call.1} parent=159 // loop_footer
            %s407 = sadd.s32 1, %s403
          $region166: #{tpu_custom_call.1} parent=159 // loop_footer_branch
            %402 = sbr.rel target = $region162
          $region167: #{tpu_custom_call.1} parent=159 // loop_exit
            _
        $region160: #{tpu_custom_call.1} parent=31 // pred_fallthru
          _
        // Predicated region
        $region179: #{tpu_custom_call.1} parent=31 // pred_check
          _
        $region180: #{tpu_custom_call.1} parent=31 // pred_check_branch
          %435 = sbr.rel (0) target = $region182
        $region181: #{tpu_custom_call.1} parent=31 // pred_region
          %436 = vsyncadd [#allocation3], 16
        $region182: #{tpu_custom_call.1} parent=31 // pred_fallthru
          _
        %s437 = sadd.s32 %s196, 5
        %s438 = sld [smem:[#allocation5 + %s437]]
        %s439 = scalar_lea.vmem %s1, %s438
        %s440 = scalar_lea.vmem [#allocation2], 5
        %p442 = scmp.lt.u32.totalorder 1, 8
        %p443 = pneg %p442
        // Predicated region
        $region183: #{tpu_custom_call.1} parent=31 // pred_check
          _
        $region184: #{tpu_custom_call.1} parent=31 // pred_check_branch
          %445 = sbr.rel (%p442) target = $region186
        $region185: #{tpu_custom_call.1} parent=31 // pred_region
          %s460 = sand.u32 1, 7
          %p461 = scmp.eq.s32.totalorder %s460, 0
          %p462 = pneg %p461
          // Predicated region
          $region198: #{tpu_custom_call.1} parent=185 // pred_check
            _
          $region199: #{tpu_custom_call.1} parent=185 // pred_check_branch
            %464 = sbr.rel (%p461) target = $region201
          $region200: #{tpu_custom_call.1} parent=185 // pred_region
            %s465 = sand.u32 1, 7
            %s466 = ssub.s32 1, %s465
            %s467 = scalar_lea.vmem %s439, %s466
            %s468 = ssub.s32 1, %s465
            %s469 = scalar_lea.vmem %s440, %s468 [#allocation2]
            %s470 = sshllo.u32 0, %s465
            loop: start=0, step=1, limit=1
            $region202: #{tpu_custom_call.1} parent=200 // loop_pre_header
              _
            $region203: #{tpu_custom_call.1} parent=200 // loop_header
              %s472 = sphi 0, %s476
              %p473 = scmp.ge.s32.totalorder %s472, 1
              %s477 = sphi %s467, %s467
              %s478 = sphi %s469, %s469
            $region204: #{tpu_custom_call.1} parent=200 // loop_header_branch
              %475 = sbr.rel (%p473) target = $region208
            $region205: #{tpu_custom_call.1} parent=200 // loop_body
              %v479 = vld [vmem:[%s477] sm:%s470]
              %480 = vst [vmem:[%s478] sm:%s470] %v479
            $region206: #{tpu_custom_call.1} parent=200 // loop_footer
              %s476 = sadd.s32 1, %s472
            $region207: #{tpu_custom_call.1} parent=200 // loop_footer_branch
              %471 = sbr.rel target = $region203
            $region208: #{tpu_custom_call.1} parent=200 // loop_exit
              _
          $region201: #{tpu_custom_call.1} parent=185 // pred_fallthru
            _
        $region186: #{tpu_custom_call.1} parent=31 // pred_fallthru
          _
        // Predicated region
        $region187: #{tpu_custom_call.1} parent=31 // pred_check
          %p446 = pneg %p442
        $region188: #{tpu_custom_call.1} parent=31 // pred_check_branch
          %448 = sbr.rel (%p446) target = $region190
        $region189: #{tpu_custom_call.1} parent=31 // pred_region
          %s449 = sshllo.u32 0, 1
          loop: start=0, step=1, limit=1
          $region191: #{tpu_custom_call.1} parent=189 // loop_pre_header
            _
          $region192: #{tpu_custom_call.1} parent=189 // loop_header
            %s451 = sphi 0, %s455
            %p452 = scmp.ge.s32.totalorder %s451, 1
            %s456 = sphi %s439, %s439
            %s457 = sphi %s440, %s440
          $region193: #{tpu_custom_call.1} parent=189 // loop_header_branch
            %454 = sbr.rel (%p452) target = $region197
          $region194: #{tpu_custom_call.1} parent=189 // loop_body
            %v458 = vld [vmem:[%s456] sm:%s449]
            %459 = vst [vmem:[%s457] sm:%s449] %v458
          $region195: #{tpu_custom_call.1} parent=189 // loop_footer
            %s455 = sadd.s32 1, %s451
          $region196: #{tpu_custom_call.1} parent=189 // loop_footer_branch
            %450 = sbr.rel target = $region192
          $region197: #{tpu_custom_call.1} parent=189 // loop_exit
            _
        $region190: #{tpu_custom_call.1} parent=31 // pred_fallthru
          _
        // Predicated region
        $region209: #{tpu_custom_call.1} parent=31 // pred_check
          _
        $region210: #{tpu_custom_call.1} parent=31 // pred_check_branch
          %483 = sbr.rel (0) target = $region212
        $region211: #{tpu_custom_call.1} parent=31 // pred_region
          %484 = vsyncadd [#allocation3], 16
        $region212: #{tpu_custom_call.1} parent=31 // pred_fallthru
          _
        %s485 = sadd.s32 %s196, 6
        %s486 = sld [smem:[#allocation5 + %s485]]
        %s487 = scalar_lea.vmem %s1, %s486
        %s488 = scalar_lea.vmem [#allocation2], 6
        %p490 = scmp.lt.u32.totalorder 1, 8
        %p491 = pneg %p490
        // Predicated region
        $region213: #{tpu_custom_call.1} parent=31 // pred_check
          _
        $region214: #{tpu_custom_call.1} parent=31 // pred_check_branch
          %493 = sbr.rel (%p490) target = $region216
        $region215: #{tpu_custom_call.1} parent=31 // pred_region
          %s508 = sand.u32 1, 7
          %p509 = scmp.eq.s32.totalorder %s508, 0
          %p510 = pneg %p509
          // Predicated region
          $region228: #{tpu_custom_call.1} parent=215 // pred_check
            _
          $region229: #{tpu_custom_call.1} parent=215 // pred_check_branch
            %512 = sbr.rel (%p509) target = $region231
          $region230: #{tpu_custom_call.1} parent=215 // pred_region
            %s513 = sand.u32 1, 7
            %s514 = ssub.s32 1, %s513
            %s515 = scalar_lea.vmem %s487, %s514
            %s516 = ssub.s32 1, %s513
            %s517 = scalar_lea.vmem %s488, %s516 [#allocation2]
            %s518 = sshllo.u32 0, %s513
            loop: start=0, step=1, limit=1
            $region232: #{tpu_custom_call.1} parent=230 // loop_pre_header
              _
            $region233: #{tpu_custom_call.1} parent=230 // loop_header
              %s520 = sphi 0, %s524
              %p521 = scmp.ge.s32.totalorder %s520, 1
              %s525 = sphi %s515, %s515
              %s526 = sphi %s517, %s517
            $region234: #{tpu_custom_call.1} parent=230 // loop_header_branch
              %523 = sbr.rel (%p521) target = $region238
            $region235: #{tpu_custom_call.1} parent=230 // loop_body
              %v527 = vld [vmem:[%s525] sm:%s518]
              %528 = vst [vmem:[%s526] sm:%s518] %v527
            $region236: #{tpu_custom_call.1} parent=230 // loop_footer
              %s524 = sadd.s32 1, %s520
            $region237: #{tpu_custom_call.1} parent=230 // loop_footer_branch
              %519 = sbr.rel target = $region233
            $region238: #{tpu_custom_call.1} parent=230 // loop_exit
              _
          $region231: #{tpu_custom_call.1} parent=215 // pred_fallthru
            _
        $region216: #{tpu_custom_call.1} parent=31 // pred_fallthru
          _
        // Predicated region
        $region217: #{tpu_custom_call.1} parent=31 // pred_check
          %p494 = pneg %p490
        $region218: #{tpu_custom_call.1} parent=31 // pred_check_branch
          %496 = sbr.rel (%p494) target = $region220
        $region219: #{tpu_custom_call.1} parent=31 // pred_region
          %s497 = sshllo.u32 0, 1
          loop: start=0, step=1, limit=1
          $region221: #{tpu_custom_call.1} parent=219 // loop_pre_header
            _
          $region222: #{tpu_custom_call.1} parent=219 // loop_header
            %s499 = sphi 0, %s503
            %p500 = scmp.ge.s32.totalorder %s499, 1
            %s504 = sphi %s487, %s487
            %s505 = sphi %s488, %s488
          $region223: #{tpu_custom_call.1} parent=219 // loop_header_branch
            %502 = sbr.rel (%p500) target = $region227
          $region224: #{tpu_custom_call.1} parent=219 // loop_body
            %v506 = vld [vmem:[%s504] sm:%s497]
            %507 = vst [vmem:[%s505] sm:%s497] %v506
          $region225: #{tpu_custom_call.1} parent=219 // loop_footer
            %s503 = sadd.s32 1, %s499
          $region226: #{tpu_custom_call.1} parent=219 // loop_footer_branch
            %498 = sbr.rel target = $region222
          $region227: #{tpu_custom_call.1} parent=219 // loop_exit
            _
        $region220: #{tpu_custom_call.1} parent=31 // pred_fallthru
          _
        // Predicated region
        $region239: #{tpu_custom_call.1} parent=31 // pred_check
          _
        $region240: #{tpu_custom_call.1} parent=31 // pred_check_branch
          %531 = sbr.rel (0) target = $region242
        $region241: #{tpu_custom_call.1} parent=31 // pred_region
          %532 = vsyncadd [#allocation3], 16
        $region242: #{tpu_custom_call.1} parent=31 // pred_fallthru
          _
        %s533 = sadd.s32 %s196, 7
        %s534 = sld [smem:[#allocation5 + %s533]]
        %s535 = scalar_lea.vmem %s1, %s534
        %s536 = scalar_lea.vmem [#allocation2], 7
        %p538 = scmp.lt.u32.totalorder 1, 8
        %p539 = pneg %p538
        // Predicated region
        $region243: #{tpu_custom_call.1} parent=31 // pred_check
          _
        $region244: #{tpu_custom_call.1} parent=31 // pred_check_branch
          %541 = sbr.rel (%p538) target = $region246
        $region245: #{tpu_custom_call.1} parent=31 // pred_region
          %s556 = sand.u32 1, 7
          %p557 = scmp.eq.s32.totalorder %s556, 0
          %p558 = pneg %p557
          // Predicated region
          $region258: #{tpu_custom_call.1} parent=245 // pred_check
            _
          $region259: #{tpu_custom_call.1} parent=245 // pred_check_branch
            %560 = sbr.rel (%p557) target = $region261
          $region260: #{tpu_custom_call.1} parent=245 // pred_region
            %s561 = sand.u32 1, 7
            %s562 = ssub.s32 1, %s561
            %s563 = scalar_lea.vmem %s535, %s562
            %s564 = ssub.s32 1, %s561
            %s565 = scalar_lea.vmem %s536, %s564 [#allocation2]
            %s566 = sshllo.u32 0, %s561
            loop: start=0, step=1, limit=1
            $region262: #{tpu_custom_call.1} parent=260 // loop_pre_header
              _
            $region263: #{tpu_custom_call.1} parent=260 // loop_header
              %s568 = sphi 0, %s572
              %p569 = scmp.ge.s32.totalorder %s568, 1
              %s573 = sphi %s563, %s563
              %s574 = sphi %s565, %s565
            $region264: #{tpu_custom_call.1} parent=260 // loop_header_branch
              %571 = sbr.rel (%p569) target = $region268
            $region265: #{tpu_custom_call.1} parent=260 // loop_body
              %v575 = vld [vmem:[%s573] sm:%s566]
              %576 = vst [vmem:[%s574] sm:%s566] %v575
            $region266: #{tpu_custom_call.1} parent=260 // loop_footer
              %s572 = sadd.s32 1, %s568
            $region267: #{tpu_custom_call.1} parent=260 // loop_footer_branch
              %567 = sbr.rel target = $region263
            $region268: #{tpu_custom_call.1} parent=260 // loop_exit
              _
          $region261: #{tpu_custom_call.1} parent=245 // pred_fallthru
            _
        $region246: #{tpu_custom_call.1} parent=31 // pred_fallthru
          _
        // Predicated region
        $region247: #{tpu_custom_call.1} parent=31 // pred_check
          %p542 = pneg %p538
        $region248: #{tpu_custom_call.1} parent=31 // pred_check_branch
          %544 = sbr.rel (%p542) target = $region250
        $region249: #{tpu_custom_call.1} parent=31 // pred_region
          %s545 = sshllo.u32 0, 1
          loop: start=0, step=1, limit=1
          $region251: #{tpu_custom_call.1} parent=249 // loop_pre_header
            _
          $region252: #{tpu_custom_call.1} parent=249 // loop_header
            %s547 = sphi 0, %s551
            %p548 = scmp.ge.s32.totalorder %s547, 1
            %s552 = sphi %s535, %s535
            %s553 = sphi %s536, %s536
          $region253: #{tpu_custom_call.1} parent=249 // loop_header_branch
            %550 = sbr.rel (%p548) target = $region257
          $region254: #{tpu_custom_call.1} parent=249 // loop_body
            %v554 = vld [vmem:[%s552] sm:%s545]
            %555 = vst [vmem:[%s553] sm:%s545] %v554
          $region255: #{tpu_custom_call.1} parent=249 // loop_footer
            %s551 = sadd.s32 1, %s547
          $region256: #{tpu_custom_call.1} parent=249 // loop_footer_branch
            %546 = sbr.rel target = $region252
          $region257: #{tpu_custom_call.1} parent=249 // loop_exit
            _
        $region250: #{tpu_custom_call.1} parent=31 // pred_fallthru
          _
        // Predicated region
        $region269: #{tpu_custom_call.1} parent=31 // pred_check
          _
        $region270: #{tpu_custom_call.1} parent=31 // pred_check_branch
          %579 = sbr.rel (0) target = $region272
        $region271: #{tpu_custom_call.1} parent=31 // pred_region
          %580 = vsyncadd [#allocation3], 16
        $region272: #{tpu_custom_call.1} parent=31 // pred_fallthru
          _
        %s581 = sadd.s32 %s196, 8
        %s582 = sld [smem:[#allocation5 + %s581]]
        %s583 = scalar_lea.vmem %s1, %s582
        %s584 = scalar_lea.vmem [#allocation2], 8
        %s585 = scalar_lea.sflag [#allocation3], 1
        %p587 = scmp.lt.u32.totalorder 1, 8
        %p588 = pneg %p587
        // Predicated region
        $region273: #{tpu_custom_call.1} parent=31 // pred_check
          _
        $region274: #{tpu_custom_call.1} parent=31 // pred_check_branch
          %590 = sbr.rel (%p587) target = $region276
        $region275: #{tpu_custom_call.1} parent=31 // pred_region
          %s605 = sand.u32 1, 7
          %p606 = scmp.eq.s32.totalorder %s605, 0
          %p607 = pneg %p606
          // Predicated region
          $region288: #{tpu_custom_call.1} parent=275 // pred_check
            _
          $region289: #{tpu_custom_call.1} parent=275 // pred_check_branch
            %609 = sbr.rel (%p606) target = $region291
          $region290: #{tpu_custom_call.1} parent=275 // pred_region
            %s610 = sand.u32 1, 7
            %s611 = ssub.s32 1, %s610
            %s612 = scalar_lea.vmem %s583, %s611
            %s613 = ssub.s32 1, %s610
            %s614 = scalar_lea.vmem %s584, %s613 [#allocation2]
            %s615 = sshllo.u32 0, %s610
            loop: start=0, step=1, limit=1
            $region292: #{tpu_custom_call.1} parent=290 // loop_pre_header
              _
            $region293: #{tpu_custom_call.1} parent=290 // loop_header
              %s617 = sphi 0, %s621
              %p618 = scmp.ge.s32.totalorder %s617, 1
              %s622 = sphi %s612, %s612
              %s623 = sphi %s614, %s614
            $region294: #{tpu_custom_call.1} parent=290 // loop_header_branch
              %620 = sbr.rel (%p618) target = $region298
            $region295: #{tpu_custom_call.1} parent=290 // loop_body
              %v624 = vld [vmem:[%s622] sm:%s615]
              %625 = vst [vmem:[%s623] sm:%s615] %v624
            $region296: #{tpu_custom_call.1} parent=290 // loop_footer
              %s621 = sadd.s32 1, %s617
            $region297: #{tpu_custom_call.1} parent=290 // loop_footer_branch
              %616 = sbr.rel target = $region293
            $region298: #{tpu_custom_call.1} parent=290 // loop_exit
              _
          $region291: #{tpu_custom_call.1} parent=275 // pred_fallthru
            _
        $region276: #{tpu_custom_call.1} parent=31 // pred_fallthru
          _
        // Predicated region
        $region277: #{tpu_custom_call.1} parent=31 // pred_check
          %p591 = pneg %p587
        $region278: #{tpu_custom_call.1} parent=31 // pred_check_branch
          %593 = sbr.rel (%p591) target = $region280
        $region279: #{tpu_custom_call.1} parent=31 // pred_region
          %s594 = sshllo.u32 0, 1
          loop: start=0, step=1, limit=1
          $region281: #{tpu_custom_call.1} parent=279 // loop_pre_header
            _
          $region282: #{tpu_custom_call.1} parent=279 // loop_header
            %s596 = sphi 0, %s600
            %p597 = scmp.ge.s32.totalorder %s596, 1
            %s601 = sphi %s583, %s583
            %s602 = sphi %s584, %s584
          $region283: #{tpu_custom_call.1} parent=279 // loop_header_branch
            %599 = sbr.rel (%p597) target = $region287
          $region284: #{tpu_custom_call.1} parent=279 // loop_body
            %v603 = vld [vmem:[%s601] sm:%s594]
            %604 = vst [vmem:[%s602] sm:%s594] %v603
          $region285: #{tpu_custom_call.1} parent=279 // loop_footer
            %s600 = sadd.s32 1, %s596
          $region286: #{tpu_custom_call.1} parent=279 // loop_footer_branch
            %595 = sbr.rel target = $region282
          $region287: #{tpu_custom_call.1} parent=279 // loop_exit
            _
        $region280: #{tpu_custom_call.1} parent=31 // pred_fallthru
          _
        // Predicated region
        $region299: #{tpu_custom_call.1} parent=31 // pred_check
          _
        $region300: #{tpu_custom_call.1} parent=31 // pred_check_branch
          %628 = sbr.rel (0) target = $region302
        $region301: #{tpu_custom_call.1} parent=31 // pred_region
          %629 = vsyncadd %s585, 16
        $region302: #{tpu_custom_call.1} parent=31 // pred_fallthru
          _
        %s630 = sadd.s32 %s196, 9
        %s631 = sld [smem:[#allocation5 + %s630]]
        %s632 = scalar_lea.vmem %s1, %s631
        %s633 = scalar_lea.vmem [#allocation2], 9
        %p635 = scmp.lt.u32.totalorder 1, 8
        %p636 = pneg %p635
        // Predicated region
        $region303: #{tpu_custom_call.1} parent=31 // pred_check
          _
        $region304: #{tpu_custom_call.1} parent=31 // pred_check_branch
          %638 = sbr.rel (%p635) target = $region306
        $region305: #{tpu_custom_call.1} parent=31 // pred_region
          %s653 = sand.u32 1, 7
          %p654 = scmp.eq.s32.totalorder %s653, 0
          %p655 = pneg %p654
          // Predicated region
          $region318: #{tpu_custom_call.1} parent=305 // pred_check
            _
          $region319: #{tpu_custom_call.1} parent=305 // pred_check_branch
            %657 = sbr.rel (%p654) target = $region321
          $region320: #{tpu_custom_call.1} parent=305 // pred_region
            %s658 = sand.u32 1, 7
            %s659 = ssub.s32 1, %s658
            %s660 = scalar_lea.vmem %s632, %s659
            %s661 = ssub.s32 1, %s658
            %s662 = scalar_lea.vmem %s633, %s661 [#allocation2]
            %s663 = sshllo.u32 0, %s658
            loop: start=0, step=1, limit=1
            $region322: #{tpu_custom_call.1} parent=320 // loop_pre_header
              _
            $region323: #{tpu_custom_call.1} parent=320 // loop_header
              %s665 = sphi 0, %s669
              %p666 = scmp.ge.s32.totalorder %s665, 1
              %s670 = sphi %s660, %s660
              %s671 = sphi %s662, %s662
            $region324: #{tpu_custom_call.1} parent=320 // loop_header_branch
              %668 = sbr.rel (%p666) target = $region328
            $region325: #{tpu_custom_call.1} parent=320 // loop_body
              %v672 = vld [vmem:[%s670] sm:%s663]
              %673 = vst [vmem:[%s671] sm:%s663] %v672
            $region326: #{tpu_custom_call.1} parent=320 // loop_footer
              %s669 = sadd.s32 1, %s665
            $region327: #{tpu_custom_call.1} parent=320 // loop_footer_branch
              %664 = sbr.rel target = $region323
            $region328: #{tpu_custom_call.1} parent=320 // loop_exit
              _
          $region321: #{tpu_custom_call.1} parent=305 // pred_fallthru
            _
        $region306: #{tpu_custom_call.1} parent=31 // pred_fallthru
          _
        // Predicated region
        $region307: #{tpu_custom_call.1} parent=31 // pred_check
          %p639 = pneg %p635
        $region308: #{tpu_custom_call.1} parent=31 // pred_check_branch
          %641 = sbr.rel (%p639) target = $region310
        $region309: #{tpu_custom_call.1} parent=31 // pred_region
          %s642 = sshllo.u32 0, 1
          loop: start=0, step=1, limit=1
          $region311: #{tpu_custom_call.1} parent=309 // loop_pre_header
            _
          $region312: #{tpu_custom_call.1} parent=309 // loop_header
            %s644 = sphi 0, %s648
            %p645 = scmp.ge.s32.totalorder %s644, 1
            %s649 = sphi %s632, %s632
            %s650 = sphi %s633, %s633
          $region313: #{tpu_custom_call.1} parent=309 // loop_header_branch
            %647 = sbr.rel (%p645) target = $region317
          $region314: #{tpu_custom_call.1} parent=309 // loop_body
            %v651 = vld [vmem:[%s649] sm:%s642]
            %652 = vst [vmem:[%s650] sm:%s642] %v651
          $region315: #{tpu_custom_call.1} parent=309 // loop_footer
            %s648 = sadd.s32 1, %s644
          $region316: #{tpu_custom_call.1} parent=309 // loop_footer_branch
            %643 = sbr.rel target = $region312
          $region317: #{tpu_custom_call.1} parent=309 // loop_exit
            _
        $region310: #{tpu_custom_call.1} parent=31 // pred_fallthru
          _
        // Predicated region
        $region329: #{tpu_custom_call.1} parent=31 // pred_check
          _
        $region330: #{tpu_custom_call.1} parent=31 // pred_check_branch
          %676 = sbr.rel (0) target = $region332
        $region331: #{tpu_custom_call.1} parent=31 // pred_region
          %677 = vsyncadd %s585, 16
        $region332: #{tpu_custom_call.1} parent=31 // pred_fallthru
          _
        %s678 = sadd.s32 %s196, 10
        %s679 = sld [smem:[#allocation5 + %s678]]
        %s680 = scalar_lea.vmem %s1, %s679
        %s681 = scalar_lea.vmem [#allocation2], 10
        %p683 = scmp.lt.u32.totalorder 1, 8
        %p684 = pneg %p683
        // Predicated region
        $region333: #{tpu_custom_call.1} parent=31 // pred_check
          _
        $region334: #{tpu_custom_call.1} parent=31 // pred_check_branch
          %686 = sbr.rel (%p683) target = $region336
        $region335: #{tpu_custom_call.1} parent=31 // pred_region
          %s701 = sand.u32 1, 7
          %p702 = scmp.eq.s32.totalorder %s701, 0
          %p703 = pneg %p702
          // Predicated region
          $region348: #{tpu_custom_call.1} parent=335 // pred_check
            _
          $region349: #{tpu_custom_call.1} parent=335 // pred_check_branch
            %705 = sbr.rel (%p702) target = $region351
          $region350: #{tpu_custom_call.1} parent=335 // pred_region
            %s706 = sand.u32 1, 7
            %s707 = ssub.s32 1, %s706
            %s708 = scalar_lea.vmem %s680, %s707
            %s709 = ssub.s32 1, %s706
            %s710 = scalar_lea.vmem %s681, %s709 [#allocation2]
            %s711 = sshllo.u32 0, %s706
            loop: start=0, step=1, limit=1
            $region352: #{tpu_custom_call.1} parent=350 // loop_pre_header
              _
            $region353: #{tpu_custom_call.1} parent=350 // loop_header
              %s713 = sphi 0, %s717
              %p714 = scmp.ge.s32.totalorder %s713, 1
              %s718 = sphi %s708, %s708
              %s719 = sphi %s710, %s710
            $region354: #{tpu_custom_call.1} parent=350 // loop_header_branch
              %716 = sbr.rel (%p714) target = $region358
            $region355: #{tpu_custom_call.1} parent=350 // loop_body
              %v720 = vld [vmem:[%s718] sm:%s711]
              %721 = vst [vmem:[%s719] sm:%s711] %v720
            $region356: #{tpu_custom_call.1} parent=350 // loop_footer
              %s717 = sadd.s32 1, %s713
            $region357: #{tpu_custom_call.1} parent=350 // loop_footer_branch
              %712 = sbr.rel target = $region353
            $region358: #{tpu_custom_call.1} parent=350 // loop_exit
              _
          $region351: #{tpu_custom_call.1} parent=335 // pred_fallthru
            _
        $region336: #{tpu_custom_call.1} parent=31 // pred_fallthru
          _
        // Predicated region
        $region337: #{tpu_custom_call.1} parent=31 // pred_check
          %p687 = pneg %p683
        $region338: #{tpu_custom_call.1} parent=31 // pred_check_branch
          %689 = sbr.rel (%p687) target = $region340
        $region339: #{tpu_custom_call.1} parent=31 // pred_region
          %s690 = sshllo.u32 0, 1
          loop: start=0, step=1, limit=1
          $region341: #{tpu_custom_call.1} parent=339 // loop_pre_header
            _
          $region342: #{tpu_custom_call.1} parent=339 // loop_header
            %s692 = sphi 0, %s696
            %p693 = scmp.ge.s32.totalorder %s692, 1
            %s697 = sphi %s680, %s680
            %s698 = sphi %s681, %s681
          $region343: #{tpu_custom_call.1} parent=339 // loop_header_branch
            %695 = sbr.rel (%p693) target = $region347
          $region344: #{tpu_custom_call.1} parent=339 // loop_body
            %v699 = vld [vmem:[%s697] sm:%s690]
            %700 = vst [vmem:[%s698] sm:%s690] %v699
          $region345: #{tpu_custom_call.1} parent=339 // loop_footer
            %s696 = sadd.s32 1, %s692
          $region346: #{tpu_custom_call.1} parent=339 // loop_footer_branch
            %691 = sbr.rel target = $region342
          $region347: #{tpu_custom_call.1} parent=339 // loop_exit
            _
        $region340: #{tpu_custom_call.1} parent=31 // pred_fallthru
          _
        // Predicated region
        $region359: #{tpu_custom_call.1} parent=31 // pred_check
          _
        $region360: #{tpu_custom_call.1} parent=31 // pred_check_branch
          %724 = sbr.rel (0) target = $region362
        $region361: #{tpu_custom_call.1} parent=31 // pred_region
          %725 = vsyncadd %s585, 16
        $region362: #{tpu_custom_call.1} parent=31 // pred_fallthru
          _
        %s726 = sadd.s32 %s196, 11
        %s727 = sld [smem:[#allocation5 + %s726]]
        %s728 = scalar_lea.vmem %s1, %s727
        %s729 = scalar_lea.vmem [#allocation2], 11
        %p731 = scmp.lt.u32.totalorder 1, 8
        %p732 = pneg %p731
        // Predicated region
        $region363: #{tpu_custom_call.1} parent=31 // pred_check
          _
        $region364: #{tpu_custom_call.1} parent=31 // pred_check_branch
          %734 = sbr.rel (%p731) target = $region366
        $region365: #{tpu_custom_call.1} parent=31 // pred_region
          %s749 = sand.u32 1, 7
          %p750 = scmp.eq.s32.totalorder %s749, 0
          %p751 = pneg %p750
          // Predicated region
          $region378: #{tpu_custom_call.1} parent=365 // pred_check
            _
          $region379: #{tpu_custom_call.1} parent=365 // pred_check_branch
            %753 = sbr.rel (%p750) target = $region381
          $region380: #{tpu_custom_call.1} parent=365 // pred_region
            %s754 = sand.u32 1, 7
            %s755 = ssub.s32 1, %s754
            %s756 = scalar_lea.vmem %s728, %s755
            %s757 = ssub.s32 1, %s754
            %s758 = scalar_lea.vmem %s729, %s757 [#allocation2]
            %s759 = sshllo.u32 0, %s754
            loop: start=0, step=1, limit=1
            $region382: #{tpu_custom_call.1} parent=380 // loop_pre_header
              _
            $region383: #{tpu_custom_call.1} parent=380 // loop_header
              %s761 = sphi 0, %s765
              %p762 = scmp.ge.s32.totalorder %s761, 1
              %s766 = sphi %s756, %s756
              %s767 = sphi %s758, %s758
            $region384: #{tpu_custom_call.1} parent=380 // loop_header_branch
              %764 = sbr.rel (%p762) target = $region388
            $region385: #{tpu_custom_call.1} parent=380 // loop_body
              %v768 = vld [vmem:[%s766] sm:%s759]
              %769 = vst [vmem:[%s767] sm:%s759] %v768
            $region386: #{tpu_custom_call.1} parent=380 // loop_footer
              %s765 = sadd.s32 1, %s761
            $region387: #{tpu_custom_call.1} parent=380 // loop_footer_branch
              %760 = sbr.rel target = $region383
            $region388: #{tpu_custom_call.1} parent=380 // loop_exit
              _
          $region381: #{tpu_custom_call.1} parent=365 // pred_fallthru
            _
        $region366: #{tpu_custom_call.1} parent=31 // pred_fallthru
          _
        // Predicated region
        $region367: #{tpu_custom_call.1} parent=31 // pred_check
          %p735 = pneg %p731
        $region368: #{tpu_custom_call.1} parent=31 // pred_check_branch
          %737 = sbr.rel (%p735) target = $region370
        $region369: #{tpu_custom_call.1} parent=31 // pred_region
          %s738 = sshllo.u32 0, 1
          loop: start=0, step=1, limit=1
          $region371: #{tpu_custom_call.1} parent=369 // loop_pre_header
            _
          $region372: #{tpu_custom_call.1} parent=369 // loop_header
            %s740 = sphi 0, %s744
            %p741 = scmp.ge.s32.totalorder %s740, 1
            %s745 = sphi %s728, %s728
            %s746 = sphi %s729, %s729
          $region373: #{tpu_custom_call.1} parent=369 // loop_header_branch
            %743 = sbr.rel (%p741) target = $region377
          $region374: #{tpu_custom_call.1} parent=369 // loop_body
            %v747 = vld [vmem:[%s745] sm:%s738]
            %748 = vst [vmem:[%s746] sm:%s738] %v747
          $region375: #{tpu_custom_call.1} parent=369 // loop_footer
            %s744 = sadd.s32 1, %s740
          $region376: #{tpu_custom_call.1} parent=369 // loop_footer_branch
            %739 = sbr.rel target = $region372
          $region377: #{tpu_custom_call.1} parent=369 // loop_exit
            _
        $region370: #{tpu_custom_call.1} parent=31 // pred_fallthru
          _
        // Predicated region
        $region389: #{tpu_custom_call.1} parent=31 // pred_check
          _
        $region390: #{tpu_custom_call.1} parent=31 // pred_check_branch
          %772 = sbr.rel (0) target = $region392
        $region391: #{tpu_custom_call.1} parent=31 // pred_region
          %773 = vsyncadd %s585, 16
        $region392: #{tpu_custom_call.1} parent=31 // pred_fallthru
          _
        %s774 = sadd.s32 %s196, 12
        %s775 = sld [smem:[#allocation5 + %s774]]
        %s776 = scalar_lea.vmem %s1, %s775
        %s777 = scalar_lea.vmem [#allocation2], 12
        %p779 = scmp.lt.u32.totalorder 1, 8
        %p780 = pneg %p779
        // Predicated region
        $region393: #{tpu_custom_call.1} parent=31 // pred_check
          _
        $region394: #{tpu_custom_call.1} parent=31 // pred_check_branch
          %782 = sbr.rel (%p779) target = $region396
        $region395: #{tpu_custom_call.1} parent=31 // pred_region
          %s797 = sand.u32 1, 7
          %p798 = scmp.eq.s32.totalorder %s797, 0
          %p799 = pneg %p798
          // Predicated region
          $region408: #{tpu_custom_call.1} parent=395 // pred_check
            _
          $region409: #{tpu_custom_call.1} parent=395 // pred_check_branch
            %801 = sbr.rel (%p798) target = $region411
          $region410: #{tpu_custom_call.1} parent=395 // pred_region
            %s802 = sand.u32 1, 7
            %s803 = ssub.s32 1, %s802
            %s804 = scalar_lea.vmem %s776, %s803
            %s805 = ssub.s32 1, %s802
            %s806 = scalar_lea.vmem %s777, %s805 [#allocation2]
            %s807 = sshllo.u32 0, %s802
            loop: start=0, step=1, limit=1
            $region412: #{tpu_custom_call.1} parent=410 // loop_pre_header
              _
            $region413: #{tpu_custom_call.1} parent=410 // loop_header
              %s809 = sphi 0, %s813
              %p810 = scmp.ge.s32.totalorder %s809, 1
              %s814 = sphi %s804, %s804
              %s815 = sphi %s806, %s806
            $region414: #{tpu_custom_call.1} parent=410 // loop_header_branch
              %812 = sbr.rel (%p810) target = $region418
            $region415: #{tpu_custom_call.1} parent=410 // loop_body
              %v816 = vld [vmem:[%s814] sm:%s807]
              %817 = vst [vmem:[%s815] sm:%s807] %v816
            $region416: #{tpu_custom_call.1} parent=410 // loop_footer
              %s813 = sadd.s32 1, %s809
            $region417: #{tpu_custom_call.1} parent=410 // loop_footer_branch
              %808 = sbr.rel target = $region413
            $region418: #{tpu_custom_call.1} parent=410 // loop_exit
              _
          $region411: #{tpu_custom_call.1} parent=395 // pred_fallthru
            _
        $region396: #{tpu_custom_call.1} parent=31 // pred_fallthru
          _
        // Predicated region
        $region397: #{tpu_custom_call.1} parent=31 // pred_check
          %p783 = pneg %p779
        $region398: #{tpu_custom_call.1} parent=31 // pred_check_branch
          %785 = sbr.rel (%p783) target = $region400
        $region399: #{tpu_custom_call.1} parent=31 // pred_region
          %s786 = sshllo.u32 0, 1
          loop: start=0, step=1, limit=1
          $region401: #{tpu_custom_call.1} parent=399 // loop_pre_header
            _
          $region402: #{tpu_custom_call.1} parent=399 // loop_header
            %s788 = sphi 0, %s792
            %p789 = scmp.ge.s32.totalorder %s788, 1
            %s793 = sphi %s776, %s776
            %s794 = sphi %s777, %s777
          $region403: #{tpu_custom_call.1} parent=399 // loop_header_branch
            %791 = sbr.rel (%p789) target = $region407
          $region404: #{tpu_custom_call.1} parent=399 // loop_body
            %v795 = vld [vmem:[%s793] sm:%s786]
            %796 = vst [vmem:[%s794] sm:%s786] %v795
          $region405: #{tpu_custom_call.1} parent=399 // loop_footer
            %s792 = sadd.s32 1, %s788
          $region406: #{tpu_custom_call.1} parent=399 // loop_footer_branch
            %787 = sbr.rel target = $region402
          $region407: #{tpu_custom_call.1} parent=399 // loop_exit
            _
        $region400: #{tpu_custom_call.1} parent=31 // pred_fallthru
          _
        // Predicated region
        $region419: #{tpu_custom_call.1} parent=31 // pred_check
          _
        $region420: #{tpu_custom_call.1} parent=31 // pred_check_branch
          %820 = sbr.rel (0) target = $region422
        $region421: #{tpu_custom_call.1} parent=31 // pred_region
          %821 = vsyncadd %s585, 16
        $region422: #{tpu_custom_call.1} parent=31 // pred_fallthru
          _
        %s822 = sadd.s32 %s196, 13
        %s823 = sld [smem:[#allocation5 + %s822]]
        %s824 = scalar_lea.vmem %s1, %s823
        %s825 = scalar_lea.vmem [#allocation2], 13
        %p827 = scmp.lt.u32.totalorder 1, 8
        %p828 = pneg %p827
        // Predicated region
        $region423: #{tpu_custom_call.1} parent=31 // pred_check
          _
        $region424: #{tpu_custom_call.1} parent=31 // pred_check_branch
          %830 = sbr.rel (%p827) target = $region426
        $region425: #{tpu_custom_call.1} parent=31 // pred_region
          %s845 = sand.u32 1, 7
          %p846 = scmp.eq.s32.totalorder %s845, 0
          %p847 = pneg %p846
          // Predicated region
          $region438: #{tpu_custom_call.1} parent=425 // pred_check
            _
          $region439: #{tpu_custom_call.1} parent=425 // pred_check_branch
            %849 = sbr.rel (%p846) target = $region441
          $region440: #{tpu_custom_call.1} parent=425 // pred_region
            %s850 = sand.u32 1, 7
            %s851 = ssub.s32 1, %s850
            %s852 = scalar_lea.vmem %s824, %s851
            %s853 = ssub.s32 1, %s850
            %s854 = scalar_lea.vmem %s825, %s853 [#allocation2]
            %s855 = sshllo.u32 0, %s850
            loop: start=0, step=1, limit=1
            $region442: #{tpu_custom_call.1} parent=440 // loop_pre_header
              _
            $region443: #{tpu_custom_call.1} parent=440 // loop_header
              %s857 = sphi 0, %s861
              %p858 = scmp.ge.s32.totalorder %s857, 1
              %s862 = sphi %s852, %s852
              %s863 = sphi %s854, %s854
            $region444: #{tpu_custom_call.1} parent=440 // loop_header_branch
              %860 = sbr.rel (%p858) target = $region448
            $region445: #{tpu_custom_call.1} parent=440 // loop_body
              %v864 = vld [vmem:[%s862] sm:%s855]
              %865 = vst [vmem:[%s863] sm:%s855] %v864
            $region446: #{tpu_custom_call.1} parent=440 // loop_footer
              %s861 = sadd.s32 1, %s857
            $region447: #{tpu_custom_call.1} parent=440 // loop_footer_branch
              %856 = sbr.rel target = $region443
            $region448: #{tpu_custom_call.1} parent=440 // loop_exit
              _
          $region441: #{tpu_custom_call.1} parent=425 // pred_fallthru
            _
        $region426: #{tpu_custom_call.1} parent=31 // pred_fallthru
          _
        // Predicated region
        $region427: #{tpu_custom_call.1} parent=31 // pred_check
          %p831 = pneg %p827
        $region428: #{tpu_custom_call.1} parent=31 // pred_check_branch
          %833 = sbr.rel (%p831) target = $region430
        $region429: #{tpu_custom_call.1} parent=31 // pred_region
          %s834 = sshllo.u32 0, 1
          loop: start=0, step=1, limit=1
          $region431: #{tpu_custom_call.1} parent=429 // loop_pre_header
            _
          $region432: #{tpu_custom_call.1} parent=429 // loop_header
            %s836 = sphi 0, %s840
            %p837 = scmp.ge.s32.totalorder %s836, 1
            %s841 = sphi %s824, %s824
            %s842 = sphi %s825, %s825
          $region433: #{tpu_custom_call.1} parent=429 // loop_header_branch
            %839 = sbr.rel (%p837) target = $region437
          $region434: #{tpu_custom_call.1} parent=429 // loop_body
            %v843 = vld [vmem:[%s841] sm:%s834]
            %844 = vst [vmem:[%s842] sm:%s834] %v843
          $region435: #{tpu_custom_call.1} parent=429 // loop_footer
            %s840 = sadd.s32 1, %s836
          $region436: #{tpu_custom_call.1} parent=429 // loop_footer_branch
            %835 = sbr.rel target = $region432
          $region437: #{tpu_custom_call.1} parent=429 // loop_exit
            _
        $region430: #{tpu_custom_call.1} parent=31 // pred_fallthru
          _
        // Predicated region
        $region449: #{tpu_custom_call.1} parent=31 // pred_check
          _
        $region450: #{tpu_custom_call.1} parent=31 // pred_check_branch
          %868 = sbr.rel (0) target = $region452
        $region451: #{tpu_custom_call.1} parent=31 // pred_region
          %869 = vsyncadd %s585, 16
        $region452: #{tpu_custom_call.1} parent=31 // pred_fallthru
          _
        %s870 = sadd.s32 %s196, 14
        %s871 = sld [smem:[#allocation5 + %s870]]
        %s872 = scalar_lea.vmem %s1, %s871
        %s873 = scalar_lea.vmem [#allocation2], 14
        %p875 = scmp.lt.u32.totalorder 1, 8
        %p876 = pneg %p875
        // Predicated region
        $region453: #{tpu_custom_call.1} parent=31 // pred_check
          _
        $region454: #{tpu_custom_call.1} parent=31 // pred_check_branch
          %878 = sbr.rel (%p875) target = $region456
        $region455: #{tpu_custom_call.1} parent=31 // pred_region
          %s893 = sand.u32 1, 7
          %p894 = scmp.eq.s32.totalorder %s893, 0
          %p895 = pneg %p894
          // Predicated region
          $region468: #{tpu_custom_call.1} parent=455 // pred_check
            _
          $region469: #{tpu_custom_call.1} parent=455 // pred_check_branch
            %897 = sbr.rel (%p894) target = $region471
          $region470: #{tpu_custom_call.1} parent=455 // pred_region
            %s898 = sand.u32 1, 7
            %s899 = ssub.s32 1, %s898
            %s900 = scalar_lea.vmem %s872, %s899
            %s901 = ssub.s32 1, %s898
            %s902 = scalar_lea.vmem %s873, %s901 [#allocation2]
            %s903 = sshllo.u32 0, %s898
            loop: start=0, step=1, limit=1
            $region472: #{tpu_custom_call.1} parent=470 // loop_pre_header
              _
            $region473: #{tpu_custom_call.1} parent=470 // loop_header
              %s905 = sphi 0, %s909
              %p906 = scmp.ge.s32.totalorder %s905, 1
              %s910 = sphi %s900, %s900
              %s911 = sphi %s902, %s902
            $region474: #{tpu_custom_call.1} parent=470 // loop_header_branch
              %908 = sbr.rel (%p906) target = $region478
            $region475: #{tpu_custom_call.1} parent=470 // loop_body
              %v912 = vld [vmem:[%s910] sm:%s903]
              %913 = vst [vmem:[%s911] sm:%s903] %v912
            $region476: #{tpu_custom_call.1} parent=470 // loop_footer
              %s909 = sadd.s32 1, %s905
            $region477: #{tpu_custom_call.1} parent=470 // loop_footer_branch
              %904 = sbr.rel target = $region473
            $region478: #{tpu_custom_call.1} parent=470 // loop_exit
              _
          $region471: #{tpu_custom_call.1} parent=455 // pred_fallthru
            _
        $region456: #{tpu_custom_call.1} parent=31 // pred_fallthru
          _
        // Predicated region
        $region457: #{tpu_custom_call.1} parent=31 // pred_check
          %p879 = pneg %p875
        $region458: #{tpu_custom_call.1} parent=31 // pred_check_branch
          %881 = sbr.rel (%p879) target = $region460
        $region459: #{tpu_custom_call.1} parent=31 // pred_region
          %s882 = sshllo.u32 0, 1
          loop: start=0, step=1, limit=1
          $region461: #{tpu_custom_call.1} parent=459 // loop_pre_header
            _
          $region462: #{tpu_custom_call.1} parent=459 // loop_header
            %s884 = sphi 0, %s888
            %p885 = scmp.ge.s32.totalorder %s884, 1
            %s889 = sphi %s872, %s872
            %s890 = sphi %s873, %s873
          $region463: #{tpu_custom_call.1} parent=459 // loop_header_branch
            %887 = sbr.rel (%p885) target = $region467
          $region464: #{tpu_custom_call.1} parent=459 // loop_body
            %v891 = vld [vmem:[%s889] sm:%s882]
            %892 = vst [vmem:[%s890] sm:%s882] %v891
          $region465: #{tpu_custom_call.1} parent=459 // loop_footer
            %s888 = sadd.s32 1, %s884
          $region466: #{tpu_custom_call.1} parent=459 // loop_footer_branch
            %883 = sbr.rel target = $region462
          $region467: #{tpu_custom_call.1} parent=459 // loop_exit
            _
        $region460: #{tpu_custom_call.1} parent=31 // pred_fallthru
          _
        // Predicated region
        $region479: #{tpu_custom_call.1} parent=31 // pred_check
          _
        $region480: #{tpu_custom_call.1} parent=31 // pred_check_branch
          %916 = sbr.rel (0) target = $region482
        $region481: #{tpu_custom_call.1} parent=31 // pred_region
          %917 = vsyncadd %s585, 16
        $region482: #{tpu_custom_call.1} parent=31 // pred_fallthru
          _
        %s918 = sadd.s32 %s196, 15
        %s919 = sld [smem:[#allocation5 + %s918]]
        %s920 = scalar_lea.vmem %s1, %s919
        %s921 = scalar_lea.vmem [#allocation2], 15
        %p923 = scmp.lt.u32.totalorder 1, 8
        %p924 = pneg %p923
        // Predicated region
        $region483: #{tpu_custom_call.1} parent=31 // pred_check
          _
        $region484: #{tpu_custom_call.1} parent=31 // pred_check_branch
          %926 = sbr.rel (%p923) target = $region486
        $region485: #{tpu_custom_call.1} parent=31 // pred_region
          %s941 = sand.u32 1, 7
          %p942 = scmp.eq.s32.totalorder %s941, 0
          %p943 = pneg %p942
          // Predicated region
          $region498: #{tpu_custom_call.1} parent=485 // pred_check
            _
          $region499: #{tpu_custom_call.1} parent=485 // pred_check_branch
            %945 = sbr.rel (%p942) target = $region501
          $region500: #{tpu_custom_call.1} parent=485 // pred_region
            %s946 = sand.u32 1, 7
            %s947 = ssub.s32 1, %s946
            %s948 = scalar_lea.vmem %s920, %s947
            %s949 = ssub.s32 1, %s946
            %s950 = scalar_lea.vmem %s921, %s949 [#allocation2]
            %s951 = sshllo.u32 0, %s946
            loop: start=0, step=1, limit=1
            $region502: #{tpu_custom_call.1} parent=500 // loop_pre_header
              _
            $region503: #{tpu_custom_call.1} parent=500 // loop_header
              %s953 = sphi 0, %s957
              %p954 = scmp.ge.s32.totalorder %s953, 1
              %s958 = sphi %s948, %s948
              %s959 = sphi %s950, %s950
            $region504: #{tpu_custom_call.1} parent=500 // loop_header_branch
              %956 = sbr.rel (%p954) target = $region508
            $region505: #{tpu_custom_call.1} parent=500 // loop_body
              %v960 = vld [vmem:[%s958] sm:%s951]
              %961 = vst [vmem:[%s959] sm:%s951] %v960
            $region506: #{tpu_custom_call.1} parent=500 // loop_footer
              %s957 = sadd.s32 1, %s953
            $region507: #{tpu_custom_call.1} parent=500 // loop_footer_branch
              %952 = sbr.rel target = $region503
            $region508: #{tpu_custom_call.1} parent=500 // loop_exit
              _
          $region501: #{tpu_custom_call.1} parent=485 // pred_fallthru
            _
        $region486: #{tpu_custom_call.1} parent=31 // pred_fallthru
          _
        // Predicated region
        $region487: #{tpu_custom_call.1} parent=31 // pred_check
          %p927 = pneg %p923
        $region488: #{tpu_custom_call.1} parent=31 // pred_check_branch
          %929 = sbr.rel (%p927) target = $region490
        $region489: #{tpu_custom_call.1} parent=31 // pred_region
          %s930 = sshllo.u32 0, 1
          loop: start=0, step=1, limit=1
          $region491: #{tpu_custom_call.1} parent=489 // loop_pre_header
            _
          $region492: #{tpu_custom_call.1} parent=489 // loop_header
            %s932 = sphi 0, %s936
            %p933 = scmp.ge.s32.totalorder %s932, 1
            %s937 = sphi %s920, %s920
            %s938 = sphi %s921, %s921
          $region493: #{tpu_custom_call.1} parent=489 // loop_header_branch
            %935 = sbr.rel (%p933) target = $region497
          $region494: #{tpu_custom_call.1} parent=489 // loop_body
            %v939 = vld [vmem:[%s937] sm:%s930]
            %940 = vst [vmem:[%s938] sm:%s930] %v939
          $region495: #{tpu_custom_call.1} parent=489 // loop_footer
            %s936 = sadd.s32 1, %s932
          $region496: #{tpu_custom_call.1} parent=489 // loop_footer_branch
            %931 = sbr.rel target = $region492
          $region497: #{tpu_custom_call.1} parent=489 // loop_exit
            _
        $region490: #{tpu_custom_call.1} parent=31 // pred_fallthru
          _
        // Predicated region
        $region509: #{tpu_custom_call.1} parent=31 // pred_check
          _
        $region510: #{tpu_custom_call.1} parent=31 // pred_check_branch
          %964 = sbr.rel (0) target = $region512
        $region511: #{tpu_custom_call.1} parent=31 // pred_region
          %965 = vsyncadd %s585, 16
        $region512: #{tpu_custom_call.1} parent=31 // pred_fallthru
          _
        %s966 = smul.u32 1, 1
        %s967 = sshll.u32 %s966, 4
        %968 = dma.done [#allocation3], %s967
        %s969 = sshll.u32 %s966, 4
        %970 = dma.done [#allocation3], %s969
        %s971 = sshll.u32 %s966, 4
        %972 = dma.done [#allocation3], %s971
        %s973 = sshll.u32 %s966, 4
        %974 = dma.done [#allocation3], %s973
        %s975 = sshll.u32 %s966, 4
        %976 = dma.done [#allocation3], %s975
        %s977 = sshll.u32 %s966, 4
        %978 = dma.done [#allocation3], %s977
        %s979 = sshll.u32 %s966, 4
        %980 = dma.done [#allocation3], %s979
        %s981 = sshll.u32 %s966, 4
        %982 = dma.done [#allocation3], %s981
        %v983 = vld [vmem:[#allocation2] sm:$0xff]
        %v984 = vld [vmem:[%s191] sm:$0xff]
        %v985 = vadd.f32 %v983, %v984
        %vm986 = vcmask 261120
        %v987 = vsel %vm986, %v985, 0.0
        %988 = vadd.xlane.f32.xlu0 %v987
        %v989 = vpop.xlane.xlu0 %988
        %v990 = vmul.f32 %v985, %v985
        %v991 = vsel %vm986, %v990, 0.0
        %992 = vadd.xlane.f32.xlu0 %v991
        %v993 = vpop.xlane.xlu0 %992
        %v994 = vmul.f32 %v989, 0.03125
        %v995 = vmul.f32 %v993, 0.03125
        %v996 = vmul.f32 %v994, %v994
        %v997 = vsub.f32 %v995, %v996
        %v998 = vmax.f32 %v997, 0.0
        %v999 = vsub.f32 %v985, %v994
        %v1000 = vadd.f32 %v998, 1e-12
        %v1001 = vrsqrt.pop %v1000
        %v1002 = vmul.f32 %v999, %v1001
        %v1004 = vlaneseq
        %v1005 = vshrl.u32 %v1004, 7
        %v1006 = vsub.s32 0, %v1005
        %v1007 = vrot.slane %v197, %v1006
        %v1009 = vmul.f32 %v1002, %v1007
        %v1011 = vlaneseq
        %v1012 = vshrl.u32 %v1011, 7
        %v1013 = vsub.s32 0, %v1012
        %v1014 = vrot.slane %v198, %v1013
        %v1016 = vadd.f32 %v1009, %v1014
        %1017 = vst.msk [vmem:[%s186] sm:$0xff] %vm986, %v1016
        %s1018 = sshll.u32 %s966, 4
        %1019 = dma.done %s585, %s1018
        %s1020 = sshll.u32 %s966, 4
        %1021 = dma.done %s585, %s1020
        %s1022 = sshll.u32 %s966, 4
        %1023 = dma.done %s585, %s1022
        %s1024 = sshll.u32 %s966, 4
        %1025 = dma.done %s585, %s1024
        %s1026 = sshll.u32 %s966, 4
        %1027 = dma.done %s585, %s1026
        %s1028 = sshll.u32 %s966, 4
        %1029 = dma.done %s585, %s1028
        %s1030 = sshll.u32 %s966, 4
        %1031 = dma.done %s585, %s1030
        %s1032 = sshll.u32 %s966, 4
        %1033 = dma.done %s585, %s1032
        %v1034 = vld [vmem:[#allocation2 + $0x8] sm:$0xff]
        %v1035 = vld [vmem:[%s191 + $0x8] sm:$0xff]
        %v1036 = vadd.f32 %v1034, %v1035
        %v1037 = vsel %vm986, %v1036, 0.0
        %1038 = vadd.xlane.f32.xlu0 %v1037
        %v1039 = vpop.xlane.xlu0 %1038
        %v1040 = vmul.f32 %v1036, %v1036
        %v1041 = vsel %vm986, %v1040, 0.0
        %1042 = vadd.xlane.f32.xlu0 %v1041
        %v1043 = vpop.xlane.xlu0 %1042
        %v1044 = vmul.f32 %v1039, 0.03125
        %v1045 = vmul.f32 %v1043, 0.03125
        %v1046 = vmul.f32 %v1044, %v1044
        %v1047 = vsub.f32 %v1045, %v1046
        %v1048 = vmax.f32 %v1047, 0.0
        %v1049 = vsub.f32 %v1036, %v1044
        %v1050 = vadd.f32 %v1048, 1e-12
        %v1051 = vrsqrt.pop %v1050
        %v1052 = vmul.f32 %v1049, %v1051
        %v1053 = vmul.f32 %v1052, %v1007
        %v1054 = vadd.f32 %v1053, %v1014
        %1055 = vst.msk [vmem:[%s186 + $0x8] sm:$0xff] %vm986, %v1054
        %s1056 = sand.u32 %s115, 1
        %s1057 = scalar_lea.sflag [#allocation7], %s1056
        %s1058 = sand.u32 %s115, 1
        %s1059 = smul.addr %s1058, 16
        %s1060 = scalar_lea.vmem [#allocation6], %s1059
        // Predicated region
        $region513: #{tpu_custom_call.1} parent=31 // pred_check
          %p1061 = pneg %p125
        $region514: #{tpu_custom_call.1} parent=31 // pred_check_branch
          %1063 = sbr.rel (%p1061) target = $region516
        $region515: #{tpu_custom_call.1} parent=31 // pred_region
          %s1064 = smul.u32 2, %s29
          %s1066 = ssub.s32 256, 256
          %1067 = vsyncadd %s1057, %s1066
          %s1068 = smul.addr %s30, 4
          %s1069 = sadd.s32 %s1064, %s1068
          %s1070 = smul.addr %s1069, 128
          %s1071 = scalar_lea.hbm %s5, %s1070
          %s1072 = sshll.u32 %s1060, 4
          %s1073 = int_to_ptr.vmem [resolvable:$true] %s1072
          %1078 = dma.vmem_to_hbm [thread:$0]  %s1073, 256, %s1071, %s1057, 128, 128, 8
        $region516: #{tpu_custom_call.1} parent=31 // pred_fallthru
          _
      $region32: #{tpu_custom_call.1} parent=5 // pred_fallthru
        _
      %p1079 = scmp.le.s32.totalorder 2, %s20
      // Predicated region
      $region517: #{tpu_custom_call.1} parent=5 // pred_check
        %p1080 = pneg %p1079
      $region518: #{tpu_custom_call.1} parent=5 // pred_check_branch
        %1082 = sbr.rel (%p1080) target = $region520
      $region519: #{tpu_custom_call.1} parent=5 // pred_region
        %s1083 = ssub.s32 %s20, 2
        // Predicated region
        $region521: #{tpu_custom_call.1} parent=519 // pred_check
          %p1084 = pneg %p131
        $region522: #{tpu_custom_call.1} parent=519 // pred_check_branch
          %1086 = sbr.rel (%p1084) target = $region524
        $region523: #{tpu_custom_call.1} parent=519 // pred_region
          %s1087 = sand.u32 %s116, 1
          %s1088 = scalar_lea.sflag [#allocation7], %s1087
          %s1089 = sand.u32 %s116, 1
          %s1090 = smul.addr %s1089, 16
          %s1091 = scalar_lea.vmem [#allocation6], %s1090
          %1092 = dma.done %s1088, 256
        $region524: #{tpu_custom_call.1} parent=519 // pred_fallthru
          _
      $region520: #{tpu_custom_call.1} parent=5 // pred_fallthru
        _
    $region6: #{tpu_custom_call.1} parent=1 // loop_footer
      %s24 = sadd.s32 1, %s20
    $region7: #{tpu_custom_call.1} parent=1 // loop_footer_branch
      %19 = sbr.rel target = $region3
    $region8: #{tpu_custom_call.1} parent=1 // loop_exit
      _
    %1093 = vsyncpa [#allocation7], 1
    %s1094 = scalar_lea.sflag [#allocation7], 1
    %1095 = vsyncpa %s1094, 1
  %1096 = vsyncmov [#allocation3]
  %s1097 = vpop.sfrf %1096
  %p1098 = scmp.eq.s32.totalorder %s1097, 0
  %p1099 = pneg %p1098
  %1101 = shalt.err (%p1099)
  %s1102 = scalar_lea.sflag [#allocation3], 1
  %1103 = vsyncmov %s1102
  %s1104 = vpop.sfrf %1103
  %p1105 = scmp.eq.s32.totalorder %s1104, 0
  %p1106 = pneg %p1105
  %1108 = shalt.err (%p1106)

</llo_original>
